<compile_context>
chip_gen: v7x
topology: tpu7x:2x2x1
jax: 0.10.0
libtpu: 0.0.40
codegen_flags: <defaults>
</compile_context>

<pallas_src>
import functools
import math

import jax
import jax.numpy as jnp
from jax.experimental import pallas as pl
from jax.experimental.pallas import tpu as pltpu


def _softmax_rows(x, approx):
    # numerically-stable softmax over the last axis; reciprocal goes to the EUP
    m = jnp.max(x, axis=-1, keepdims=True)
    e = jnp.exp(x - m)
    s = jnp.sum(e, axis=-1, keepdims=True)
    if approx:
        return e * pl.reciprocal(s, approx=True)
    return e / s


def fib_kernel(h_s_ref, h_c_ref, w_s_ref, b_s_ref, w_c_ref, b_c_ref,
               out_s_ref, out_c_ref, *, approx_softmax):
    bt, L, D = h_s_ref.shape
    mxu_dtype = h_s_ref.dtype          # feed the MXU in the input dtype (bf16 stays bf16)

    hs3 = h_s_ref[...]                 # (Bt, L, D) native dtype
    hc3 = h_c_ref[...]
    hs2 = hs3.reshape(bt * L, D)       # fold batch into the MXU M dimension
    hc2 = hc3.reshape(bt * L, D)

    # Fused projections: one (Bt*L, D) @ (D, 4D) matmul per stream.
    # Packing order along the output dim: [q | k | v | gate].  The 1/sqrt(D)
    # softmax scale is already folded into the q block of W and b.
    proj_s = (jnp.dot(hs2, w_s_ref[...], preferred_element_type=jnp.float32)
              + b_s_ref[...])          # (Bt*L, 4D) f32
    proj_c = (jnp.dot(hc2, w_c_ref[...], preferred_element_type=jnp.float32)
              + b_c_ref[...])

    # TODO(synk): when D % 128 != 0 these column slices are not lane-aligned
    # (pad D to a multiple of 128 in the wrapper for lane-dense slices/stores).
    def split(proj):
        q = proj[:, 0 * D:1 * D].reshape(bt, L, D)
        k = proj[:, 1 * D:2 * D].reshape(bt, L, D)
        v = proj[:, 2 * D:3 * D].reshape(bt, L, D)
        g = jax.nn.sigmoid(proj[:, 3 * D:4 * D]).reshape(bt, L, D)  # f32 gate
        return q, k, v, g

    q_s, k_s, v_s, g_sc = split(proj_s)
    q_c, k_c, v_c, g_cs = split(proj_c)

    def cross_attend(q, k, v):
        # Contraction on the last dim of both operands -> no explicit K transpose
        # (verify with pl.lower_as_mlir that no vxpose is inserted per target gen).
        s = jnp.einsum("bld,bmd->blm",
                       q.astype(mxu_dtype), k.astype(mxu_dtype),
                       preferred_element_type=jnp.float32)
        p = _softmax_rows(s, approx_softmax)
        return jnp.einsum("blm,bmd->bld",
                          p.astype(mxu_dtype), v.astype(mxu_dtype),
                          preferred_element_type=jnp.float32)

    # TODO(synk): for long L (bt*L*L f32 scores reaching a few MiB) switch to a
    # flash-style online-softmax loop over K/V tiles instead of full (L, L).
    ctx_sc = cross_attend(q_s, k_c, v_c)   # s <- c direction
    ctx_cs = cross_attend(q_c, k_s, v_s)   # c <- s direction

    out_s_ref[...] = (hs3.astype(jnp.float32) + g_sc * ctx_sc).astype(out_s_ref.dtype)
    out_c_ref[...] = (hc3.astype(jnp.float32) + g_cs * ctx_cs).astype(out_c_ref.dtype)


def _chip_config():
    """Per-generation tuning knobs; conservative fallback if unknown."""
    kind = ""
    try:
        kind = jax.devices()[0].device_kind.lower()
    except Exception:
        pass
    mib = 1024 * 1024
    if "v7" in kind:
        # 2 TensorCores, 64 MiB physical VMEM: keep >= 2 grid steps and leave
        # ~12 MiB headroom for Mosaic internal scratch / spill space.
        return dict(min_grid_steps=2, target_rows=256,
                    default_scoped=32 * mib, vmem_cap=52 * mib)
    if "v5e" in kind or "v5 lite" in kind or "v5lite" in kind:
        # 1 TC, 128 MiB physical, 16 MiB default scoped limit, 128-wide MXU.
        return dict(min_grid_steps=1, target_rows=128,
                    default_scoped=16 * mib, vmem_cap=104 * mib)
    if "v6" in kind:
        return dict(min_grid_steps=1, target_rows=256,
                    default_scoped=32 * mib, vmem_cap=104 * mib)
    if "v4" in kind or "v5p" in kind or "v5" in kind:
        # megacore generations: 2 TCs share "parallel" grid axes.
        return dict(min_grid_steps=2, target_rows=256,
                    default_scoped=32 * mib, vmem_cap=104 * mib)
    # Unknown: assume the tightest budget (v7x-like) so we never over-commit.
    return dict(min_grid_steps=2, target_rows=256,
                default_scoped=16 * mib, vmem_cap=52 * mib)


def _pick_block_batch(B, L, target_rows, min_steps):
    """Smallest batch chunk whose bt*L reaches an MXU-friendly row count while
    keeping >= min_steps grid steps (both TensorCores busy on 2-TC parts);
    otherwise the largest bt that still honours the step constraint."""
    best = None
    for bt in range(1, B + 1):
        if B % bt:
            continue
        if B // bt < min_steps:
            break
        best = bt
        if bt * L >= target_rows:
            return bt
    return best if best is not None else B


def _vmem_estimate(bt, L, D, act_itemsize, w_itemsize):
    """Honest per-step VMEM footprint: pipelined blocks + in-kernel temporaries."""
    act_blocks = 2 * 4 * bt * L * D * act_itemsize              # 2 in + 2 out, double-buffered
    weights = 2 * (D * 4 * D * w_itemsize + 4 * D * 4)           # packed W (single-buf) + f32 bias
    proj_f32 = 2 * bt * L * 4 * D * 4                            # (Bt*L, 4D) f32, both streams
    qkvg_f32 = 2 * 4 * bt * L * D * 4                            # materialized q/k/v/gate slices
    mxu_casts = 2 * 3 * bt * L * D * act_itemsize                # q/k/v copies fed to the MXU
    scores = 2 * (3 * bt * L * L * 4 + bt * L * L * act_itemsize)  # s, e, p (f32) + p cast
    ctx_resid = 2 * 2 * bt * L * D * 4                           # ctx + f32 residual
    return act_blocks + weights + proj_f32 + qkvg_f32 + mxu_casts + scores + ctx_resid


def feature_interaction_bridge(h_s, h_c, params, *, block_batch=None, approx_softmax=True):
    """h_s, h_c: [B, L, D]; params: dict of (D, D) weights and (1, D) biases.

    Note: approx_softmax=True uses pl.reciprocal(approx=True) for the softmax
    denominator (~1e-3 relative error in row normalization); set False for an
    exact divide."""
    B, L, D = h_s.shape
    assert h_c.shape == (B, L, D)

    act_dtype = h_s.dtype
    itemsize = jnp.dtype(act_dtype).itemsize
    cfg = _chip_config()
    scale = 1.0 / math.sqrt(D)

    # Pack the four per-stream projections [q | k | v | gate] into one wide
    # weight/bias per stream (4 kernel inputs instead of 16), folding the
    # softmax scale into the q block (one-time tiny host-side op).
    def pack(wq, wk, wv, wg, bq, bk, bv, bg):
        w = jnp.concatenate([wq * scale, wk, wv, wg], axis=1).astype(act_dtype)
        b = jnp.concatenate([bq * scale, bk, bv, bg], axis=1).astype(jnp.float32)
        return w, b

    w_s_pack, b_s_pack = pack(params["w_qs"], params["w_ks"], params["w_vs"],
                              params["w_gsc"], params["b_qs"], params["b_ks"],
                              params["b_vs"], params["b_gsc"])
    w_c_pack, b_c_pack = pack(params["w_qc"], params["w_kc"], params["w_vc"],
                              params["w_gcs"], params["b_qc"], params["b_kc"],
                              params["b_vc"], params["b_gcs"])
    w_itemsize = jnp.dtype(w_s_pack.dtype).itemsize

    if block_batch is not None:
        bt = block_batch
    else:
        bt = _pick_block_batch(B, L, cfg["target_rows"], cfg["min_grid_steps"])
        # Shrink bt while the honest estimate overshoots the per-chip budget.
        divisors = sorted((d for d in range(1, B + 1) if B % d == 0), reverse=True)
        while bt > 1 and _vmem_estimate(bt, L, D, itemsize, w_itemsize) > cfg["vmem_cap"]:
            smaller = [d for d in divisors if d < bt]
            if not smaller:
                break
            bt = smaller[0]
    assert B % bt == 0
    nb = B // bt

    # TODO(synk): for D large enough that the two resident packed weights alone
    # approach the cap (D >~ 1.2k on v7x), add an N-tile grid axis over the 4D
    # packed output dim (aligned to the q|k|v|gate splits) instead of holding
    # the full (D, 4D) weights resident.
    vmem_est = _vmem_estimate(bt, L, D, itemsize, w_itemsize)
    vmem_limit = int(min(cfg["vmem_cap"],
                         max(int(vmem_est * 1.4), cfg["default_scoped"])))

    cost = pl.CostEstimate(
        flops=16 * B * L * D * D + 8 * B * L * L * D,
        transcendentals=2 * B * L * L + 2 * B * L * D,
        bytes_accessed=4 * B * L * D * itemsize
        + 2 * (D * 4 * D * w_itemsize + 4 * D * 4),
    )

    kernel = functools.partial(fib_kernel, approx_softmax=approx_softmax)
    out_shapes = (jax.ShapeDtypeStruct((B, L, D), h_s.dtype),
                  jax.ShapeDtypeStruct((B, L, D), h_c.dtype))

    def build(single_buffer_weights):
        act_spec = pl.BlockSpec((bt, L, D), lambda i: (i, 0, 0))
        w_kw = {}
        if single_buffer_weights and hasattr(pl, "Buffered"):
            # Constant index_map -> the block never changes across the grid;
            # double-buffering it only wastes VMEM, so keep a single buffer.
            w_kw = dict(pipeline_mode=pl.Buffered(1))
        w_spec = pl.BlockSpec((D, 4 * D), lambda i: (0, 0), **w_kw)
        b_spec = pl.BlockSpec((1, 4 * D), lambda i: (0, 0), **w_kw)
        grid_spec = pltpu.PrefetchScalarGridSpec(
            num_scalar_prefetch=0,
            grid=(nb,),
            in_specs=[act_spec, act_spec, w_spec, b_spec, w_spec, b_spec],
            out_specs=[act_spec, act_spec],
        )
        return pl.pallas_call(
            kernel,
            out_shape=out_shapes,
            grid_spec=grid_spec,
            compiler_params=pltpu.CompilerParams(
                dimension_semantics=("parallel",),
                vmem_limit_bytes=vmem_limit),
            cost_estimate=cost,
        )

    args = (h_s, h_c, w_s_pack, b_s_pack, w_c_pack, b_c_pack)
    try:
        return build(single_buffer_weights=True)(*args)
    except Exception:
        # Fallback for toolchains that reject single-buffered (Buffered(1)) specs.
        return build(single_buffer_weights=False)(*args)


def _reference(h_s, h_c, params):
    """Pure-JAX reference mirroring the PyTorch forward."""
    D = h_s.shape[-1]
    scale = 1.0 / math.sqrt(D)

    def lin(x, w, b):
        return x @ w + b

    q_s = lin(h_s, params["w_qs"], params["b_qs"])
    k_c = lin(h_c, params["w_kc"], params["b_kc"])
    v_c = lin(h_c, params["w_vc"], params["b_vc"])
    a = jax.nn.softmax(jnp.einsum("bld,bmd->blm", q_s, k_c) * scale, axis=-1)
    ctx = jnp.einsum("blm,bmd->bld", a, v_c)
    gate = jax.nn.sigmoid(lin(h_s, params["w_gsc"], params["b_gsc"]))
    hs_u = h_s + gate * ctx

    q_c = lin(h_c, params["w_qc"], params["b_qc"])
    k_s = lin(h_s, params["w_ks"], params["b_ks"])
    v_s = lin(h_s, params["w_vs"], params["b_vs"])
    a2 = jax.nn.softmax(jnp.einsum("bld,bmd->blm", q_c, k_s) * scale, axis=-1)
    ctx2 = jnp.einsum("blm,bmd->bld", a2, v_s)
    gate2 = jax.nn.sigmoid(lin(h_c, params["w_gcs"], params["b_gcs"]))
    hc_u = h_c + gate2 * ctx2
    return hs_u, hc_u


def _init_params(key, d_model):
    """Deterministic synthetic init (PyTorch Linear default: U(-1/sqrt(D), 1/sqrt(D)))."""
    bound = 1.0 / math.sqrt(d_model)
    names = ["qs", "kc", "vc", "qc", "ks", "vs", "gsc", "gcs"]
    params = {}
    for name in names:
        key, kw, kb = jax.random.split(key, 3)
        # stored pre-transposed: (D_in, D_out)
        params[f"w_{name}"] = jax.random.uniform(
            kw, (d_model, d_model), jnp.float32, -bound, bound)
        params[f"b_{name}"] = jax.random.uniform(
            kb, (1, d_model), jnp.float32, -bound, bound)
    return params


if __name__ == "__main__":
    B, L, D = 2, 8, 32
    key = jax.random.PRNGKey(0)
    k1, k2, k3 = jax.random.split(key, 3)
    h_s = jax.random.normal(k1, (B, L, D), jnp.float32)
    h_c = jax.random.normal(k2, (B, L, D), jnp.float32)
    params = _init_params(k3, D)

    out_s, out_c = feature_interaction_bridge(h_s, h_c, params)
    jax.block_until_ready((out_s, out_c))

    ref_s, ref_c = _reference(h_s, h_c, params)
    # approx=True reciprocal in the softmax loosens the tolerance slightly vs exact.
    assert jnp.allclose(out_s, ref_s, atol=2e-3, rtol=2e-3)
    assert jnp.allclose(out_c, ref_c, atol=2e-3, rtol=2e-3)

    print("KERNEL_OK")
</pallas_src>

<mosaic_0001>
module attributes {stable_mosaic.version = 11 : i64} {
  func.func @fib_kernel(%arg0: i32, %arg1: memref<1x8x32xf32, #tpu.memory_space<vmem>>, %arg2: memref<1x8x32xf32, #tpu.memory_space<vmem>>, %arg3: memref<32x128xf32, #tpu.memory_space<vmem>>, %arg4: memref<1x128xf32, #tpu.memory_space<vmem>>, %arg5: memref<32x128xf32, #tpu.memory_space<vmem>>, %arg6: memref<1x128xf32, #tpu.memory_space<vmem>>, %arg7: memref<1x8x32xf32, #tpu.memory_space<vmem>>, %arg8: memref<1x8x32xf32, #tpu.memory_space<vmem>>) attributes {dimension_semantics = [#tpu.dimension_semantics<parallel>], iteration_bounds = array<i64: 2>, scalar_prefetch = 0 : i64, scratch_operands = 0 : i64, tpu.core_type = #tpu.core_type<tc>, window_params = [{transform_indices = @transform_0, window_bounds = array<i64: 1, 8, 32>}, {transform_indices = @transform_1, window_bounds = array<i64: 1, 8, 32>}, {pipeline_mode = #tpu.pipeline_mode<synchronous>, transform_indices = @transform_2, window_bounds = array<i64: 32, 128>}, {pipeline_mode = #tpu.pipeline_mode<synchronous>, transform_indices = @transform_3, window_bounds = array<i64: 1, 128>}, {pipeline_mode = #tpu.pipeline_mode<synchronous>, transform_indices = @transform_4, window_bounds = array<i64: 32, 128>}, {pipeline_mode = #tpu.pipeline_mode<synchronous>, transform_indices = @transform_5, window_bounds = array<i64: 1, 128>}, {transform_indices = @transform_6, window_bounds = array<i64: 1, 8, 32>}, {transform_indices = @transform_7, window_bounds = array<i64: 1, 8, 32>}]} {
    %c0 = arith.constant 0 : index
    %c0_0 = arith.constant 0 : index
    %c0_1 = arith.constant 0 : index
    %0 = vector.load %arg1[%c0, %c0_0, %c0_1] : memref<1x8x32xf32, #tpu.memory_space<vmem>>, vector<1x8x32xf32>
    %c0_2 = arith.constant 0 : index
    %c0_3 = arith.constant 0 : index
    %c0_4 = arith.constant 0 : index
    %1 = vector.load %arg2[%c0_2, %c0_3, %c0_4] : memref<1x8x32xf32, #tpu.memory_space<vmem>>, vector<1x8x32xf32>
    %2 = vector.shape_cast %0 : vector<1x8x32xf32> to vector<8x32xf32>
    %3 = vector.shape_cast %1 : vector<1x8x32xf32> to vector<8x32xf32>
    %c0_5 = arith.constant 0 : index
    %c0_6 = arith.constant 0 : index
    %4 = vector.load %arg3[%c0_5, %c0_6] : memref<32x128xf32, #tpu.memory_space<vmem>>, vector<32x128xf32>
    %cst = arith.constant dense<0.000000e+00> : vector<8x128xf32>
    %5 = tpu.matmul %2, %4, %cst {dimension_numbers = #tpu.dot_dimension_numbers<[1], [0], [0], [1], [0, 0, 1, 1], [], []>} : vector<8x32xf32>, vector<32x128xf32>, vector<8x128xf32> -> vector<8x128xf32>
    %c0_7 = arith.constant 0 : index
    %c0_8 = arith.constant 0 : index
    %6 = vector.load %arg4[%c0_7, %c0_8] : memref<1x128xf32, #tpu.memory_space<vmem>>, vector<1x128xf32>
    %7 = vector.broadcast %6 : vector<1x128xf32> to vector<8x128xf32>
    %8 = arith.addf %5, %7 : vector<8x128xf32>
    %c0_9 = arith.constant 0 : index
    %c0_10 = arith.constant 0 : index
    %9 = vector.load %arg5[%c0_9, %c0_10] : memref<32x128xf32, #tpu.memory_space<vmem>>, vector<32x128xf32>
    %cst_11 = arith.constant dense<0.000000e+00> : vector<8x128xf32>
    %10 = tpu.matmul %3, %9, %cst_11 {dimension_numbers = #tpu.dot_dimension_numbers<[1], [0], [0], [1], [0, 0, 1, 1], [], []>} : vector<8x32xf32>, vector<32x128xf32>, vector<8x128xf32> -> vector<8x128xf32>
    %c0_12 = arith.constant 0 : index
    %c0_13 = arith.constant 0 : index
    %11 = vector.load %arg6[%c0_12, %c0_13] : memref<1x128xf32, #tpu.memory_space<vmem>>, vector<1x128xf32>
    %12 = vector.broadcast %11 : vector<1x128xf32> to vector<8x128xf32>
    %13 = arith.addf %10, %12 : vector<8x128xf32>
    %14 = vector.extract_strided_slice %8 {offsets = [0, 0], sizes = [8, 32], strides = [1, 1]} : vector<8x128xf32> to vector<8x32xf32>
    %15 = vector.shape_cast %14 : vector<8x32xf32> to vector<1x8x32xf32>
    %16 = vector.extract_strided_slice %8 {offsets = [0, 32], sizes = [8, 32], strides = [1, 1]} : vector<8x128xf32> to vector<8x32xf32>
    %17 = vector.shape_cast %16 : vector<8x32xf32> to vector<1x8x32xf32>
    %18 = vector.extract_strided_slice %8 {offsets = [0, 64], sizes = [8, 32], strides = [1, 1]} : vector<8x128xf32> to vector<8x32xf32>
    %19 = vector.shape_cast %18 : vector<8x32xf32> to vector<1x8x32xf32>
    %20 = vector.extract_strided_slice %8 {offsets = [0, 96], sizes = [8, 32], strides = [1, 1]} : vector<8x128xf32> to vector<8x32xf32>
    %21 = arith.negf %20 : vector<8x32xf32>
    %22 = math.exp %21 : vector<8x32xf32>
    %cst_14 = arith.constant 1.000000e+00 : f32
    %23 = vector.broadcast %cst_14 : f32 to vector<8x32xf32>
    %24 = arith.addf %23, %22 : vector<8x32xf32>
    %25 = arith.divf %23, %24 : vector<8x32xf32>
    %26 = vector.shape_cast %25 : vector<8x32xf32> to vector<1x8x32xf32>
    %27 = vector.extract_strided_slice %13 {offsets = [0, 0], sizes = [8, 32], strides = [1, 1]} : vector<8x128xf32> to vector<8x32xf32>
    %28 = vector.shape_cast %27 : vector<8x32xf32> to vector<1x8x32xf32>
    %29 = vector.extract_strided_slice %13 {offsets = [0, 32], sizes = [8, 32], strides = [1, 1]} : vector<8x128xf32> to vector<8x32xf32>
    %30 = vector.shape_cast %29 : vector<8x32xf32> to vector<1x8x32xf32>
    %31 = vector.extract_strided_slice %13 {offsets = [0, 64], sizes = [8, 32], strides = [1, 1]} : vector<8x128xf32> to vector<8x32xf32>
    %32 = vector.shape_cast %31 : vector<8x32xf32> to vector<1x8x32xf32>
    %33 = vector.extract_strided_slice %13 {offsets = [0, 96], sizes = [8, 32], strides = [1, 1]} : vector<8x128xf32> to vector<8x32xf32>
    %34 = arith.negf %33 : vector<8x32xf32>
    %35 = math.exp %34 : vector<8x32xf32>
    %cst_15 = arith.constant 1.000000e+00 : f32
    %36 = vector.broadcast %cst_15 : f32 to vector<8x32xf32>
    %37 = arith.addf %36, %35 : vector<8x32xf32>
    %38 = arith.divf %36, %37 : vector<8x32xf32>
    %39 = vector.shape_cast %38 : vector<8x32xf32> to vector<1x8x32xf32>
    "tpu.trace_start"() <{level = 10 : i32, message = "bld,bmd->blm"}> : () -> ()
    %cst_16 = arith.constant dense<0.000000e+00> : vector<1x8x8xf32>
    %40 = tpu.matmul %15, %30, %cst_16 {dimension_numbers = #tpu.dot_dimension_numbers<[2], [2], [1], [1], [0, 0, 0, 1, 1, 1], [0], [0]>} : vector<1x8x32xf32>, vector<1x8x32xf32>, vector<1x8x8xf32> -> vector<1x8x8xf32>
    "tpu.trace_stop"() : () -> ()
    %cst_17 = arith.constant dense<0xFF800000> : vector<1x8xf32>
    %41 = vector.multi_reduction <maximumf>, %40, %cst_17 [2] : vector<1x8x8xf32> to vector<1x8xf32>
    %42 = vector.shape_cast %41 : vector<1x8xf32> to vector<1x8x1xf32>
    %43 = vector.broadcast %42 : vector<1x8x1xf32> to vector<1x8x8xf32>
    %44 = arith.subf %40, %43 : vector<1x8x8xf32>
    %45 = math.exp %44 : vector<1x8x8xf32>
    %cst_18 = arith.constant dense<0.000000e+00> : vector<1x8xf32>
    %46 = vector.multi_reduction <add>, %45, %cst_18 [2] : vector<1x8x8xf32> to vector<1x8xf32>
    %47 = vector.shape_cast %46 : vector<1x8xf32> to vector<1x8x1xf32>
    %48 = tpu.reciprocal %47 {approx = true} : vector<1x8x1xf32> -> vector<1x8x1xf32>
    %49 = vector.broadcast %48 : vector<1x8x1xf32> to vector<1x8x8xf32>
    %50 = arith.mulf %45, %49 : vector<1x8x8xf32>
    "tpu.trace_start"() <{level = 10 : i32, message = "blm,bmd->bld"}> : () -> ()
    %cst_19 = arith.constant dense<0.000000e+00> : vector<1x8x32xf32>
    %51 = tpu.matmul %50, %32, %cst_19 {dimension_numbers = #tpu.dot_dimension_numbers<[2], [1], [1], [2], [0, 0, 0, 1, 1, 2], [0], [0]>} : vector<1x8x8xf32>, vector<1x8x32xf32>, vector<1x8x32xf32> -> vector<1x8x32xf32>
    "tpu.trace_stop"() : () -> ()
    "tpu.trace_start"() <{level = 10 : i32, message = "bld,bmd->blm"}> : () -> ()
    %cst_20 = arith.constant dense<0.000000e+00> : vector<1x8x8xf32>
    %52 = tpu.matmul %28, %17, %cst_20 {dimension_numbers = #tpu.dot_dimension_numbers<[2], [2], [1], [1], [0, 0, 0, 1, 1, 1], [0], [0]>} : vector<1x8x32xf32>, vector<1x8x32xf32>, vector<1x8x8xf32> -> vector<1x8x8xf32>
    "tpu.trace_stop"() : () -> ()
    %cst_21 = arith.constant dense<0xFF800000> : vector<1x8xf32>
    %53 = vector.multi_reduction <maximumf>, %52, %cst_21 [2] : vector<1x8x8xf32> to vector<1x8xf32>
    %54 = vector.shape_cast %53 : vector<1x8xf32> to vector<1x8x1xf32>
    %55 = vector.broadcast %54 : vector<1x8x1xf32> to vector<1x8x8xf32>
    %56 = arith.subf %52, %55 : vector<1x8x8xf32>
    %57 = math.exp %56 : vector<1x8x8xf32>
    %cst_22 = arith.constant dense<0.000000e+00> : vector<1x8xf32>
    %58 = vector.multi_reduction <add>, %57, %cst_22 [2] : vector<1x8x8xf32> to vector<1x8xf32>
    %59 = vector.shape_cast %58 : vector<1x8xf32> to vector<1x8x1xf32>
    %60 = tpu.reciprocal %59 {approx = true} : vector<1x8x1xf32> -> vector<1x8x1xf32>
    %61 = vector.broadcast %60 : vector<1x8x1xf32> to vector<1x8x8xf32>
    %62 = arith.mulf %57, %61 : vector<1x8x8xf32>
    "tpu.trace_start"() <{level = 10 : i32, message = "blm,bmd->bld"}> : () -> ()
    %cst_23 = arith.constant dense<0.000000e+00> : vector<1x8x32xf32>
    %63 = tpu.matmul %62, %19, %cst_23 {dimension_numbers = #tpu.dot_dimension_numbers<[2], [1], [1], [2], [0, 0, 0, 1, 1, 2], [0], [0]>} : vector<1x8x8xf32>, vector<1x8x32xf32>, vector<1x8x32xf32> -> vector<1x8x32xf32>
    "tpu.trace_stop"() : () -> ()
    %64 = arith.mulf %26, %51 : vector<1x8x32xf32>
    %65 = arith.addf %0, %64 : vector<1x8x32xf32>
    %c0_24 = arith.constant 0 : index
    %c0_25 = arith.constant 0 : index
    %c0_26 = arith.constant 0 : index
    %66 = vector.load %arg7[%c0_24, %c0_25, %c0_26] : memref<1x8x32xf32, #tpu.memory_space<vmem>>, vector<1x8x32xf32>
    tpu.vector_store %arg7[%c0_24, %c0_25, %c0_26], %65 {strides = array<i32>} : memref<1x8x32xf32, #tpu.memory_space<vmem>>, vector<1x8x32xf32>,
    %67 = arith.mulf %39, %63 : vector<1x8x32xf32>
    %68 = arith.addf %1, %67 : vector<1x8x32xf32>
    %c0_27 = arith.constant 0 : index
    %c0_28 = arith.constant 0 : index
    %c0_29 = arith.constant 0 : index
    %69 = vector.load %arg8[%c0_27, %c0_28, %c0_29] : memref<1x8x32xf32, #tpu.memory_space<vmem>>, vector<1x8x32xf32>
    tpu.vector_store %arg8[%c0_27, %c0_28, %c0_29], %68 {strides = array<i32>} : memref<1x8x32xf32, #tpu.memory_space<vmem>>, vector<1x8x32xf32>,
    return
  }
  func.func @transform_0(%arg0: i32) -> (i32, i32, i32) {
    %c0_i32 = arith.constant 0 : i32
    %c0_i32_0 = arith.constant 0 : i32
    %c0_i32_1 = arith.constant 0 : i32
    return %arg0, %c0_i32, %c0_i32_0 : i32, i32, i32
  }
  func.func @transform_1(%arg0: i32) -> (i32, i32, i32) {
    %c0_i32 = arith.constant 0 : i32
    %c0_i32_0 = arith.constant 0 : i32
    %c0_i32_1 = arith.constant 0 : i32
    return %arg0, %c0_i32, %c0_i32_0 : i32, i32, i32
  }
  func.func @transform_2(%arg0: i32) -> (i32, i32) {
    %c0_i32 = arith.constant 0 : i32
    %c0_i32_0 = arith.constant 0 : i32
    %c0_i32_1 = arith.constant 0 : i32
    return %c0_i32, %c0_i32_0 : i32, i32
  }
  func.func @transform_3(%arg0: i32) -> (i32, i32) {
    %c0_i32 = arith.constant 0 : i32
    %c0_i32_0 = arith.constant 0 : i32
    %c0_i32_1 = arith.constant 0 : i32
    return %c0_i32, %c0_i32_0 : i32, i32
  }
  func.func @transform_4(%arg0: i32) -> (i32, i32) {
    %c0_i32 = arith.constant 0 : i32
    %c0_i32_0 = arith.constant 0 : i32
    %c0_i32_1 = arith.constant 0 : i32
    return %c0_i32, %c0_i32_0 : i32, i32
  }
  func.func @transform_5(%arg0: i32) -> (i32, i32) {
    %c0_i32 = arith.constant 0 : i32
    %c0_i32_0 = arith.constant 0 : i32
    %c0_i32_1 = arith.constant 0 : i32
    return %c0_i32, %c0_i32_0 : i32, i32
  }
  func.func @transform_6(%arg0: i32) -> (i32, i32, i32) {
    %c0_i32 = arith.constant 0 : i32
    %c0_i32_0 = arith.constant 0 : i32
    %c0_i32_1 = arith.constant 0 : i32
    return %arg0, %c0_i32, %c0_i32_0 : i32, i32, i32
  }
  func.func @transform_7(%arg0: i32) -> (i32, i32, i32) {
    %c0_i32 = arith.constant 0 : i32
    %c0_i32_0 = arith.constant 0 : i32
    %c0_i32_1 = arith.constant 0 : i32
    return %arg0, %c0_i32, %c0_i32_0 : i32, i32, i32
  }
}

module attributes {stable_mosaic.version = 11 : i64} {
  func.func @fib_kernel(%arg0: i32, %arg1: memref<1x8x32xf32, #tpu.memory_space<vmem>>, %arg2: memref<1x8x32xf32, #tpu.memory_space<vmem>>, %arg3: memref<32x128xf32, #tpu.memory_space<vmem>>, %arg4: memref<1x128xf32, #tpu.memory_space<vmem>>, %arg5: memref<32x128xf32, #tpu.memory_space<vmem>>, %arg6: memref<1x128xf32, #tpu.memory_space<vmem>>, %arg7: memref<1x8x32xf32, #tpu.memory_space<vmem>>, %arg8: memref<1x8x32xf32, #tpu.memory_space<vmem>>) attributes {dimension_semantics = [#tpu.dimension_semantics<parallel>], iteration_bounds = array<i64: 2>, scalar_prefetch = 0 : i64, scratch_operands = 0 : i64, tpu.core_type = #tpu.core_type<tc>, window_params = [{transform_indices = @transform_0, window_bounds = array<i64: 1, 8, 32>}, {transform_indices = @transform_1, window_bounds = array<i64: 1, 8, 32>}, {pipeline_mode = #tpu.pipeline_mode<synchronous>, transform_indices = @transform_2, window_bounds = array<i64: 32, 128>}, {pipeline_mode = #tpu.pipeline_mode<synchronous>, transform_indices = @transform_3, window_bounds = array<i64: 1, 128>}, {pipeline_mode = #tpu.pipeline_mode<synchronous>, transform_indices = @transform_4, window_bounds = array<i64: 32, 128>}, {pipeline_mode = #tpu.pipeline_mode<synchronous>, transform_indices = @transform_5, window_bounds = array<i64: 1, 128>}, {transform_indices = @transform_6, window_bounds = array<i64: 1, 8, 32>}, {transform_indices = @transform_7, window_bounds = array<i64: 1, 8, 32>}]} {
    %c0 = arith.constant 0 : index
    %c0_0 = arith.constant 0 : index
    %c0_1 = arith.constant 0 : index
    %0 = vector.load %arg1[%c0, %c0_0, %c0_1] : memref<1x8x32xf32, #tpu.memory_space<vmem>>, vector<1x8x32xf32>
    %c0_2 = arith.constant 0 : index
    %c0_3 = arith.constant 0 : index
    %c0_4 = arith.constant 0 : index
    %1 = vector.load %arg2[%c0_2, %c0_3, %c0_4] : memref<1x8x32xf32, #tpu.memory_space<vmem>>, vector<1x8x32xf32>
    %2 = vector.shape_cast %0 : vector<1x8x32xf32> to vector<8x32xf32>
    %3 = vector.shape_cast %1 : vector<1x8x32xf32> to vector<8x32xf32>
    %c0_5 = arith.constant 0 : index
    %c0_6 = arith.constant 0 : index
    %4 = vector.load %arg3[%c0_5, %c0_6] : memref<32x128xf32, #tpu.memory_space<vmem>>, vector<32x128xf32>
    %cst = arith.constant dense<0.000000e+00> : vector<8x128xf32>
    %5 = tpu.matmul %2, %4, %cst {dimension_numbers = #tpu.dot_dimension_numbers<[1], [0], [0], [1], [0, 0, 1, 1], [], []>} : vector<8x32xf32>, vector<32x128xf32>, vector<8x128xf32> -> vector<8x128xf32>
    %c0_7 = arith.constant 0 : index
    %c0_8 = arith.constant 0 : index
    %6 = vector.load %arg4[%c0_7, %c0_8] : memref<1x128xf32, #tpu.memory_space<vmem>>, vector<1x128xf32>
    %7 = vector.broadcast %6 : vector<1x128xf32> to vector<8x128xf32>
    %8 = arith.addf %5, %7 : vector<8x128xf32>
    %c0_9 = arith.constant 0 : index
    %c0_10 = arith.constant 0 : index
    %9 = vector.load %arg5[%c0_9, %c0_10] : memref<32x128xf32, #tpu.memory_space<vmem>>, vector<32x128xf32>
    %cst_11 = arith.constant dense<0.000000e+00> : vector<8x128xf32>
    %10 = tpu.matmul %3, %9, %cst_11 {dimension_numbers = #tpu.dot_dimension_numbers<[1], [0], [0], [1], [0, 0, 1, 1], [], []>} : vector<8x32xf32>, vector<32x128xf32>, vector<8x128xf32> -> vector<8x128xf32>
    %c0_12 = arith.constant 0 : index
    %c0_13 = arith.constant 0 : index
    %11 = vector.load %arg6[%c0_12, %c0_13] : memref<1x128xf32, #tpu.memory_space<vmem>>, vector<1x128xf32>
    %12 = vector.broadcast %11 : vector<1x128xf32> to vector<8x128xf32>
    %13 = arith.addf %10, %12 : vector<8x128xf32>
    %14 = vector.extract_strided_slice %8 {offsets = [0, 0], sizes = [8, 32], strides = [1, 1]} : vector<8x128xf32> to vector<8x32xf32>
    %15 = vector.shape_cast %14 : vector<8x32xf32> to vector<1x8x32xf32>
    %16 = vector.extract_strided_slice %8 {offsets = [0, 32], sizes = [8, 32], strides = [1, 1]} : vector<8x128xf32> to vector<8x32xf32>
    %17 = vector.shape_cast %16 : vector<8x32xf32> to vector<1x8x32xf32>
    %18 = vector.extract_strided_slice %8 {offsets = [0, 64], sizes = [8, 32], strides = [1, 1]} : vector<8x128xf32> to vector<8x32xf32>
    %19 = vector.shape_cast %18 : vector<8x32xf32> to vector<1x8x32xf32>
    %20 = vector.extract_strided_slice %8 {offsets = [0, 96], sizes = [8, 32], strides = [1, 1]} : vector<8x128xf32> to vector<8x32xf32>
    %21 = arith.negf %20 : vector<8x32xf32>
    %22 = math.exp %21 : vector<8x32xf32>
    %cst_14 = arith.constant 1.000000e+00 : f32
    %23 = vector.broadcast %cst_14 : f32 to vector<8x32xf32>
    %24 = arith.addf %23, %22 : vector<8x32xf32>
    %25 = arith.divf %23, %24 : vector<8x32xf32>
    %26 = vector.shape_cast %25 : vector<8x32xf32> to vector<1x8x32xf32>
    %27 = vector.extract_strided_slice %13 {offsets = [0, 0], sizes = [8, 32], strides = [1, 1]} : vector<8x128xf32> to vector<8x32xf32>
    %28 = vector.shape_cast %27 : vector<8x32xf32> to vector<1x8x32xf32>
    %29 = vector.extract_strided_slice %13 {offsets = [0, 32], sizes = [8, 32], strides = [1, 1]} : vector<8x128xf32> to vector<8x32xf32>
    %30 = vector.shape_cast %29 : vector<8x32xf32> to vector<1x8x32xf32>
    %31 = vector.extract_strided_slice %13 {offsets = [0, 64], sizes = [8, 32], strides = [1, 1]} : vector<8x128xf32> to vector<8x32xf32>
    %32 = vector.shape_cast %31 : vector<8x32xf32> to vector<1x8x32xf32>
    %33 = vector.extract_strided_slice %13 {offsets = [0, 96], sizes = [8, 32], strides = [1, 1]} : vector<8x128xf32> to vector<8x32xf32>
    %34 = arith.negf %33 : vector<8x32xf32>
    %35 = math.exp %34 : vector<8x32xf32>
    %cst_15 = arith.constant 1.000000e+00 : f32
    %36 = vector.broadcast %cst_15 : f32 to vector<8x32xf32>
    %37 = arith.addf %36, %35 : vector<8x32xf32>
    %38 = arith.divf %36, %37 : vector<8x32xf32>
    %39 = vector.shape_cast %38 : vector<8x32xf32> to vector<1x8x32xf32>
    "tpu.trace_start"() <{level = 10 : i32, message = "bld,bmd->blm"}> : () -> ()
    %cst_16 = arith.constant dense<0.000000e+00> : vector<1x8x8xf32>
    %40 = tpu.matmul %15, %30, %cst_16 {dimension_numbers = #tpu.dot_dimension_numbers<[2], [2], [1], [1], [0, 0, 0, 1, 1, 1], [0], [0]>} : vector<1x8x32xf32>, vector<1x8x32xf32>, vector<1x8x8xf32> -> vector<1x8x8xf32>
    "tpu.trace_stop"() : () -> ()
    %cst_17 = arith.constant dense<0xFF800000> : vector<1x8xf32>
    %41 = vector.multi_reduction <maximumf>, %40, %cst_17 [2] : vector<1x8x8xf32> to vector<1x8xf32>
    %42 = vector.shape_cast %41 : vector<1x8xf32> to vector<1x8x1xf32>
    %43 = vector.broadcast %42 : vector<1x8x1xf32> to vector<1x8x8xf32>
    %44 = arith.subf %40, %43 : vector<1x8x8xf32>
    %45 = math.exp %44 : vector<1x8x8xf32>
    %cst_18 = arith.constant dense<0.000000e+00> : vector<1x8xf32>
    %46 = vector.multi_reduction <add>, %45, %cst_18 [2] : vector<1x8x8xf32> to vector<1x8xf32>
    %47 = vector.shape_cast %46 : vector<1x8xf32> to vector<1x8x1xf32>
    %48 = tpu.reciprocal %47 {approx = true} : vector<1x8x1xf32> -> vector<1x8x1xf32>
    %49 = vector.broadcast %48 : vector<1x8x1xf32> to vector<1x8x8xf32>
    %50 = arith.mulf %45, %49 : vector<1x8x8xf32>
    "tpu.trace_start"() <{level = 10 : i32, message = "blm,bmd->bld"}> : () -> ()
    %cst_19 = arith.constant dense<0.000000e+00> : vector<1x8x32xf32>
    %51 = tpu.matmul %50, %32, %cst_19 {dimension_numbers = #tpu.dot_dimension_numbers<[2], [1], [1], [2], [0, 0, 0, 1, 1, 2], [0], [0]>} : vector<1x8x8xf32>, vector<1x8x32xf32>, vector<1x8x32xf32> -> vector<1x8x32xf32>
    "tpu.trace_stop"() : () -> ()
    "tpu.trace_start"() <{level = 10 : i32, message = "bld,bmd->blm"}> : () -> ()
    %cst_20 = arith.constant dense<0.000000e+00> : vector<1x8x8xf32>
    %52 = tpu.matmul %28, %17, %cst_20 {dimension_numbers = #tpu.dot_dimension_numbers<[2], [2], [1], [1], [0, 0, 0, 1, 1, 1], [0], [0]>} : vector<1x8x32xf32>, vector<1x8x32xf32>, vector<1x8x8xf32> -> vector<1x8x8xf32>
    "tpu.trace_stop"() : () -> ()
    %cst_21 = arith.constant dense<0xFF800000> : vector<1x8xf32>
    %53 = vector.multi_reduction <maximumf>, %52, %cst_21 [2] : vector<1x8x8xf32> to vector<1x8xf32>
    %54 = vector.shape_cast %53 : vector<1x8xf32> to vector<1x8x1xf32>
    %55 = vector.broadcast %54 : vector<1x8x1xf32> to vector<1x8x8xf32>
    %56 = arith.subf %52, %55 : vector<1x8x8xf32>
    %57 = math.exp %56 : vector<1x8x8xf32>
    %cst_22 = arith.constant dense<0.000000e+00> : vector<1x8xf32>
    %58 = vector.multi_reduction <add>, %57, %cst_22 [2] : vector<1x8x8xf32> to vector<1x8xf32>
    %59 = vector.shape_cast %58 : vector<1x8xf32> to vector<1x8x1xf32>
    %60 = tpu.reciprocal %59 {approx = true} : vector<1x8x1xf32> -> vector<1x8x1xf32>
    %61 = vector.broadcast %60 : vector<1x8x1xf32> to vector<1x8x8xf32>
    %62 = arith.mulf %57, %61 : vector<1x8x8xf32>
    "tpu.trace_start"() <{level = 10 : i32, message = "blm,bmd->bld"}> : () -> ()
    %cst_23 = arith.constant dense<0.000000e+00> : vector<1x8x32xf32>
    %63 = tpu.matmul %62, %19, %cst_23 {dimension_numbers = #tpu.dot_dimension_numbers<[2], [1], [1], [2], [0, 0, 0, 1, 1, 2], [0], [0]>} : vector<1x8x8xf32>, vector<1x8x32xf32>, vector<1x8x32xf32> -> vector<1x8x32xf32>
    "tpu.trace_stop"() : () -> ()
    %64 = arith.mulf %26, %51 : vector<1x8x32xf32>
    %65 = arith.addf %0, %64 : vector<1x8x32xf32>
    %c0_24 = arith.constant 0 : index
    %c0_25 = arith.constant 0 : index
    %c0_26 = arith.constant 0 : index
    %66 = vector.load %arg7[%c0_24, %c0_25, %c0_26] : memref<1x8x32xf32, #tpu.memory_space<vmem>>, vector<1x8x32xf32>
    tpu.vector_store %arg7[%c0_24, %c0_25, %c0_26], %65 {strides = array<i32>} : memref<1x8x32xf32, #tpu.memory_space<vmem>>, vector<1x8x32xf32>,
    %67 = arith.mulf %39, %63 : vector<1x8x32xf32>
    %68 = arith.addf %1, %67 : vector<1x8x32xf32>
    %c0_27 = arith.constant 0 : index
    %c0_28 = arith.constant 0 : index
    %c0_29 = arith.constant 0 : index
    %69 = vector.load %arg8[%c0_27, %c0_28, %c0_29] : memref<1x8x32xf32, #tpu.memory_space<vmem>>, vector<1x8x32xf32>
    tpu.vector_store %arg8[%c0_27, %c0_28, %c0_29], %68 {strides = array<i32>} : memref<1x8x32xf32, #tpu.memory_space<vmem>>, vector<1x8x32xf32>,
    return
  }
  func.func @transform_0(%arg0: i32) -> (i32, i32, i32) {
    %c0_i32 = arith.constant 0 : i32
    %c0_i32_0 = arith.constant 0 : i32
    %c0_i32_1 = arith.constant 0 : i32
    return %arg0, %c0_i32, %c0_i32_0 : i32, i32, i32
  }
  func.func @transform_1(%arg0: i32) -> (i32, i32, i32) {
    %c0_i32 = arith.constant 0 : i32
    %c0_i32_0 = arith.constant 0 : i32
    %c0_i32_1 = arith.constant 0 : i32
    return %arg0, %c0_i32, %c0_i32_0 : i32, i32, i32
  }
  func.func @transform_2(%arg0: i32) -> (i32, i32) {
    %c0_i32 = arith.constant 0 : i32
    %c0_i32_0 = arith.constant 0 : i32
    %c0_i32_1 = arith.constant 0 : i32
    return %c0_i32, %c0_i32_0 : i32, i32
  }
  func.func @transform_3(%arg0: i32) -> (i32, i32) {
    %c0_i32 = arith.constant 0 : i32
    %c0_i32_0 = arith.constant 0 : i32
    %c0_i32_1 = arith.constant 0 : i32
    return %c0_i32, %c0_i32_0 : i32, i32
  }
  func.func @transform_4(%arg0: i32) -> (i32, i32) {
    %c0_i32 = arith.constant 0 : i32
    %c0_i32_0 = arith.constant 0 : i32
    %c0_i32_1 = arith.constant 0 : i32
    return %c0_i32, %c0_i32_0 : i32, i32
  }
  func.func @transform_5(%arg0: i32) -> (i32, i32) {
    %c0_i32 = arith.constant 0 : i32
    %c0_i32_0 = arith.constant 0 : i32
    %c0_i32_1 = arith.constant 0 : i32
    return %c0_i32, %c0_i32_0 : i32, i32
  }
  func.func @transform_6(%arg0: i32) -> (i32, i32, i32) {
    %c0_i32 = arith.constant 0 : i32
    %c0_i32_0 = arith.constant 0 : i32
    %c0_i32_1 = arith.constant 0 : i32
    return %arg0, %c0_i32, %c0_i32_0 : i32, i32, i32
  }
  func.func @transform_7(%arg0: i32) -> (i32, i32, i32) {
    %c0_i32 = arith.constant 0 : i32
    %c0_i32_0 = arith.constant 0 : i32
    %c0_i32_1 = arith.constant 0 : i32
    return %arg0, %c0_i32, %c0_i32_0 : i32, i32, i32
  }
}

</mosaic_0001>

<llo_original>
// kernel: tpu_custom_call.1
$region0: #{tpu_custom_call.1}
  #allocation0 [shape = 'u32[]', space=smem, size = 0x4, offset = 0x4, fixed_abs, tag = 'smem constant byte address 0x4 - core index']
  #allocation1 [shape = 'u32[144,128]{1,0:T(1,128)}', space=vmem, size = 0x12000, scoped, tag = 'internal scratch']
  %s0 = inlined_call_operand.hbm [shape: f32[2,8,32], index: 0, kind: input, shape index: {}]
  %s1 = inlined_call_operand.hbm [shape: f32[2,8,32], index: 1, kind: input, shape index: {}]
  %s2 = inlined_call_operand.hbm [shape: f32[32,128], index: 2, kind: input, shape index: {}]
  %s3 = inlined_call_operand.vmem [shape: f32[1,128], index: 3, kind: input, shape index: {}]
  %s4 = inlined_call_operand.hbm [shape: f32[32,128], index: 4, kind: input, shape index: {}]
  %s5 = inlined_call_operand.vmem [shape: f32[1,128], index: 5, kind: input, shape index: {}]
  %s6 = inlined_call_operand.hbm [shape: f32[2,8,32], index: 6, kind: output, shape index: {0}]
  %s7 = inlined_call_operand.hbm [shape: f32[2,8,32], index: 7, kind: output, shape index: {1}]
  %8 = xla_tuple %s6, %s7
  %s9 = sld [smem:[#allocation0]]
  $region81: #{tpu_custom_call.1} parent=0
    _
  %s11 = ssub.s32 1, %s9
  %s12 = scalar_select 0, %s11, %s9
  $region1: #{tpu_custom_call.1} parent=0
    #allocation2 [shape = 'u8[8192]{0}', space=vmem, size = 0x2000, scoped, tag = 'input window, operand 0']
    #allocation3 [shape = 's32[2]{0}', space=sflag, size = 0x8, scoped, tag = 'scoped memory for tpu_custom_call.1']
    #allocation4 [shape = 's32[2]{0}', space=sflag, size = 0x8, scoped, tag = 'scoped memory for tpu_custom_call.1']
    #allocation5 [shape = 'u8[8192]{0}', space=vmem, size = 0x2000, scoped, tag = 'input window, operand 1']
    #allocation6 [shape = 's32[2]{0}', space=sflag, size = 0x8, scoped, tag = 'scoped memory for tpu_custom_call.1']
    #allocation7 [shape = 'u8[16384]{0}', space=vmem, size = 0x4000, scoped, tag = 'input window, operand 2, single buffered']
    #allocation8 [shape = 'u8[16384]{0}', space=vmem, size = 0x4000, scoped, tag = 'input window, operand 4, single buffered']
    #allocation9 [shape = 's32[1]{0}', space=sflag, size = 0x4, scoped, tag = 'scoped memory for tpu_custom_call.1']
    #allocation10 [shape = 'u8[8192]{0}', space=vmem, size = 0x2000, scoped, tag = 'output window, operand 0']
    #allocation11 [shape = 'u8[8192]{0}', space=vmem, size = 0x2000, scoped, tag = 'output window, operand 1']
    #allocation12 [shape = 's32[2]{0}', space=sflag, size = 0x8, scoped, tag = 'scoped memory for tpu_custom_call.1']
    %13 = vsyncpa [#allocation3], 0
    %s14 = scalar_lea.sflag [#allocation3], 1
    %15 = vsyncpa %s14, 0
    %16 = vsyncpa [#allocation6], 0
    %s17 = scalar_lea.sflag [#allocation6], 1
    %18 = vsyncpa %s17, 0
    %19 = vsyncpa [#allocation9], 0
    %20 = vsyncpa [#allocation4], 0
    %s21 = scalar_lea.sflag [#allocation4], 1
    %22 = vsyncpa %s21, 0
    %23 = vsyncpa [#allocation12], 0
    %s24 = scalar_lea.sflag [#allocation12], 1
    %25 = vsyncpa %s24, 0
    loop: start=0, step=1, limit=4
    $region2: #{tpu_custom_call.1} parent=1 // loop_pre_header
      _
    $region3: #{tpu_custom_call.1} parent=1 // loop_header
      %s27 = sphi 0, %s31
      %p28 = scmp.ge.s32.totalorder %s27, 4
      %s37 = sphi 0, %s39
      %s40 = sphi 0, %s37
      %s41 = sphi 0, %s40
      %s57 = sphi 0, %s41
      %s63 = sphi 0, %s65
      %s66 = sphi 0, %s63
      %s67 = sphi 0, %s66
      %s83 = sphi 0, %s67
      %s87 = sphi 0, %s87
      %s89 = sphi 0, %s87
      %s90 = sphi 0, %s89
      %s104 = sphi 0, %s90
      %s108 = sphi 0, %s108
      %s110 = sphi 0, %s108
      %s111 = sphi 0, %s110
      %s125 = sphi 0, %s111
      %s129 = sphi 0, %s129
      %s131 = sphi 0, %s129
      %s132 = sphi 0, %s131
      %s146 = sphi 0, %s132
      %s150 = sphi 0, %s150
      %s152 = sphi 0, %s150
      %s153 = sphi 0, %s152
      %s167 = sphi 0, %s153
      %s173 = sphi 0, %s175
      %s176 = sphi 0, %s173
      %s177 = sphi 0, %s176
      %s193 = sphi 0, %s177
      %s199 = sphi 0, %s201
      %s202 = sphi 0, %s199
      %s203 = sphi 0, %s202
      %s219 = sphi 0, %s203
    $region4: #{tpu_custom_call.1} parent=1 // loop_header_branch
      %30 = sbr.rel (%p28) target = $region8
    $region5: #{tpu_custom_call.1} parent=1 // loop_body
      %s32 = ssub.s32 %s27, 1
      %s33 = ssub.s32 %s27, 2
      %s34 = sadd.s32 %s27, 1
      %s35 = ssub.s32 %s27, %s34
      %p36 = scmp.eq.s32.totalorder %s35, 0
      %s38 = sadd.s32 %s37, 1
      %s39 = scalar_select %p36, %s37, %s38
      %p42 = pneg %p36
      %p43 = scmp.eq.s32.totalorder %s27, 1
      %p44 = por %p42, %p43
      %p45 = scmp.ne.s32.totalorder %s37, %s40
      %p46 = scmp.eq.s32.totalorder %s27, 0
      %p47 = por %p45, %p46
      %p48 = scmp.ne.s32.totalorder %s37, %s40
      %p49 = scmp.eq.s32.totalorder %s32, 1
      %p50 = por %p48, %p49
      %p51 = scmp.ne.s32.totalorder %s40, %s41
      %p52 = scmp.eq.s32.totalorder %s32, 0
      %p53 = por %p51, %p52
      %p54 = scmp.ne.s32.totalorder %s40, %s41
      %p55 = scmp.eq.s32.totalorder %s33, 1
      %p56 = por %p54, %p55
      %p58 = scmp.ne.s32.totalorder %s41, %s57
      %p59 = scmp.eq.s32.totalorder %s33, 0
      %p60 = por %p58, %p59
      %s61 = ssub.s32 %s27, %s34
      %p62 = scmp.eq.s32.totalorder %s61, 0
      %s64 = sadd.s32 %s63, 1
      %s65 = scalar_select %p62, %s63, %s64
      %p68 = pneg %p62
      %p69 = scmp.eq.s32.totalorder %s27, 1
      %p70 = por %p68, %p69
      %p71 = scmp.ne.s32.totalorder %s63, %s66
      %p72 = scmp.eq.s32.totalorder %s27, 0
      %p73 = por %p71, %p72
      %p74 = scmp.ne.s32.totalorder %s63, %s66
      %p75 = scmp.eq.s32.totalorder %s32, 1
      %p76 = por %p74, %p75
      %p77 = scmp.ne.s32.totalorder %s66, %s67
      %p78 = scmp.eq.s32.totalorder %s32, 0
      %p79 = por %p77, %p78
      %p80 = scmp.ne.s32.totalorder %s66, %s67
      %p81 = scmp.eq.s32.totalorder %s33, 1
      %p82 = por %p80, %p81
      %p84 = scmp.ne.s32.totalorder %s67, %s83
      %p85 = scmp.eq.s32.totalorder %s33, 0
      %p86 = por %p84, %p85
      %s88 = sadd.s32 %s87, 1
      %p91 = scmp.eq.s32.totalorder %s27, 1
      %p92 = scmp.ne.s32.totalorder %s87, %s89
      %p93 = scmp.eq.s32.totalorder %s27, 0
      %p94 = por %p92, %p93
      %p95 = scmp.ne.s32.totalorder %s87, %s89
      %p96 = scmp.eq.s32.totalorder %s32, 1
      %p97 = por %p95, %p96
      %p98 = scmp.ne.s32.totalorder %s89, %s90
      %p99 = scmp.eq.s32.totalorder %s32, 0
      %p100 = por %p98, %p99
      %p101 = scmp.ne.s32.totalorder %s89, %s90
      %p102 = scmp.eq.s32.totalorder %s33, 1
      %p103 = por %p101, %p102
      %p105 = scmp.ne.s32.totalorder %s90, %s104
      %p106 = scmp.eq.s32.totalorder %s33, 0
      %p107 = por %p105, %p106
      %s109 = sadd.s32 %s108, 1
      %p112 = scmp.eq.s32.totalorder %s27, 1
      %p113 = scmp.ne.s32.totalorder %s108, %s110
      %p114 = scmp.eq.s32.totalorder %s27, 0
      %p115 = por %p113, %p114
      %p116 = scmp.ne.s32.totalorder %s108, %s110
      %p117 = scmp.eq.s32.totalorder %s32, 1
      %p118 = por %p116, %p117
      %p119 = scmp.ne.s32.totalorder %s110, %s111
      %p120 = scmp.eq.s32.totalorder %s32, 0
      %p121 = por %p119, %p120
      %p122 = scmp.ne.s32.totalorder %s110, %s111
      %p123 = scmp.eq.s32.totalorder %s33, 1
      %p124 = por %p122, %p123
      %p126 = scmp.ne.s32.totalorder %s111, %s125
      %p127 = scmp.eq.s32.totalorder %s33, 0
      %p128 = por %p126, %p127
      %s130 = sadd.s32 %s129, 1
      %p133 = scmp.eq.s32.totalorder %s27, 1
      %p134 = scmp.ne.s32.totalorder %s129, %s131
      %p135 = scmp.eq.s32.totalorder %s27, 0
      %p136 = por %p134, %p135
      %p137 = scmp.ne.s32.totalorder %s129, %s131
      %p138 = scmp.eq.s32.totalorder %s32, 1
      %p139 = por %p137, %p138
      %p140 = scmp.ne.s32.totalorder %s131, %s132
      %p141 = scmp.eq.s32.totalorder %s32, 0
      %p142 = por %p140, %p141
      %p143 = scmp.ne.s32.totalorder %s131, %s132
      %p144 = scmp.eq.s32.totalorder %s33, 1
      %p145 = por %p143, %p144
      %p147 = scmp.ne.s32.totalorder %s132, %s146
      %p148 = scmp.eq.s32.totalorder %s33, 0
      %p149 = por %p147, %p148
      %s151 = sadd.s32 %s150, 1
      %p154 = scmp.eq.s32.totalorder %s27, 1
      %p155 = scmp.ne.s32.totalorder %s150, %s152
      %p156 = scmp.eq.s32.totalorder %s27, 0
      %p157 = por %p155, %p156
      %p158 = scmp.ne.s32.totalorder %s150, %s152
      %p159 = scmp.eq.s32.totalorder %s32, 1
      %p160 = por %p158, %p159
      %p161 = scmp.ne.s32.totalorder %s152, %s153
      %p162 = scmp.eq.s32.totalorder %s32, 0
      %p163 = por %p161, %p162
      %p164 = scmp.ne.s32.totalorder %s152, %s153
      %p165 = scmp.eq.s32.totalorder %s33, 1
      %p166 = por %p164, %p165
      %p168 = scmp.ne.s32.totalorder %s153, %s167
      %p169 = scmp.eq.s32.totalorder %s33, 0
      %p170 = por %p168, %p169
      %s171 = ssub.s32 %s27, %s34
      %p172 = scmp.eq.s32.totalorder %s171, 0
      %s174 = sadd.s32 %s173, 1
      %s175 = scalar_select %p172, %s173, %s174
      %p178 = pneg %p172
      %p179 = scmp.eq.s32.totalorder %s27, 1
      %p180 = por %p178, %p179
      %p181 = scmp.ne.s32.totalorder %s173, %s176
      %p182 = scmp.eq.s32.totalorder %s27, 0
      %p183 = por %p181, %p182
      %p184 = scmp.ne.s32.totalorder %s173, %s176
      %p185 = scmp.eq.s32.totalorder %s32, 1
      %p186 = por %p184, %p185
      %p187 = scmp.ne.s32.totalorder %s176, %s177
      %p188 = scmp.eq.s32.totalorder %s32, 0
      %p189 = por %p187, %p188
      %p190 = scmp.ne.s32.totalorder %s176, %s177
      %p191 = scmp.eq.s32.totalorder %s33, 1
      %p192 = por %p190, %p191
      %p194 = scmp.ne.s32.totalorder %s177, %s193
      %p195 = scmp.eq.s32.totalorder %s33, 0
      %p196 = por %p194, %p195
      %s197 = ssub.s32 %s27, %s34
      %p198 = scmp.eq.s32.totalorder %s197, 0
      %s200 = sadd.s32 %s199, 1
      %s201 = scalar_select %p198, %s199, %s200
      %p204 = pneg %p198
      %p205 = scmp.eq.s32.totalorder %s27, 1
      %p206 = por %p204, %p205
      %p207 = scmp.ne.s32.totalorder %s199, %s202
      %p208 = scmp.eq.s32.totalorder %s27, 0
      %p209 = por %p207, %p208
      %p210 = scmp.ne.s32.totalorder %s199, %s202
      %p211 = scmp.eq.s32.totalorder %s32, 1
      %p212 = por %p210, %p211
      %p213 = scmp.ne.s32.totalorder %s202, %s203
      %p214 = scmp.eq.s32.totalorder %s32, 0
      %p215 = por %p213, %p214
      %p216 = scmp.ne.s32.totalorder %s202, %s203
      %p217 = scmp.eq.s32.totalorder %s33, 1
      %p218 = por %p216, %p217
      %p220 = scmp.ne.s32.totalorder %s203, %s219
      %p221 = scmp.eq.s32.totalorder %s33, 0
      %p222 = por %p220, %p221
      %p223 = scmp.le.s32.totalorder 1, %s27
      %p224 = scmp.lt.s32.totalorder %s27, 3
      %p225 = pnand %p223, %p224
      %p226 = pneg %p225
      // Predicated region
      $region9: #{tpu_custom_call.1} parent=5 // pred_check
        _
      $region10: #{tpu_custom_call.1} parent=5 // pred_check_branch
        %228 = sbr.rel (%p225) target = $region12
      $region11: #{tpu_custom_call.1} parent=5 // pred_region
        %s229 = ssub.s32 %s27, 1
        // Predicated region
        $region13: #{tpu_custom_call.1} parent=11 // pred_check
          %p230 = pneg %p100
        $region14: #{tpu_custom_call.1} parent=11 // pred_check_branch
          %232 = sbr.rel (%p230) target = $region16
        $region15: #{tpu_custom_call.1} parent=11 // pred_region
          %s234 = ssub.s32 512, 512
          %235 = vsyncadd [#allocation6], %s234
          %s236 = sshll.u32 [#allocation7], 4
          %s237 = int_to_ptr.vmem [resolvable:$true] %s236
          %242 = dma.hbm_to_vmem [thread:$0]  %s2, 512, %s237, [#allocation6], 128, 128, 8
        $region16: #{tpu_custom_call.1} parent=11 // pred_fallthru
          _
        // Predicated region
        $region17: #{tpu_custom_call.1} parent=11 // pred_check
          %p243 = pneg %p121
        $region18: #{tpu_custom_call.1} parent=11 // pred_check_branch
          %245 = sbr.rel (%p243) target = $region20
        $region19: #{tpu_custom_call.1} parent=11 // pred_region
          _
        $region20: #{tpu_custom_call.1} parent=11 // pred_fallthru
          _
        // Predicated region
        $region21: #{tpu_custom_call.1} parent=11 // pred_check
          %p246 = pneg %p142
        $region22: #{tpu_custom_call.1} parent=11 // pred_check_branch
          %248 = sbr.rel (%p246) target = $region24
        $region23: #{tpu_custom_call.1} parent=11 // pred_region
          %s250 = ssub.s32 512, 512
          %251 = vsyncadd [#allocation9], %s250
          %s252 = sshll.u32 [#allocation8], 4
          %s253 = int_to_ptr.vmem [resolvable:$true] %s252
          %258 = dma.hbm_to_vmem [thread:$0]  %s4, 512, %s253, [#allocation9], 128, 128, 8
        $region24: #{tpu_custom_call.1} parent=11 // pred_fallthru
          _
        // Predicated region
        $region25: #{tpu_custom_call.1} parent=11 // pred_check
          %p259 = pneg %p163
        $region26: #{tpu_custom_call.1} parent=11 // pred_check_branch
          %261 = sbr.rel (%p259) target = $region28
        $region27: #{tpu_custom_call.1} parent=11 // pred_region
          _
        $region28: #{tpu_custom_call.1} parent=11 // pred_fallthru
          _
      $region12: #{tpu_custom_call.1} parent=5 // pred_fallthru
        _
      %p262 = scmp.lt.s32.totalorder %s27, 2
      // Predicated region
      $region29: #{tpu_custom_call.1} parent=5 // pred_check
        %p263 = pneg %p262
      $region30: #{tpu_custom_call.1} parent=5 // pred_check_branch
        %265 = sbr.rel (%p263) target = $region32
      $region31: #{tpu_custom_call.1} parent=5 // pred_region
        // Predicated region
        $region33: #{tpu_custom_call.1} parent=31 // pred_check
          %p266 = pneg %p47
        $region34: #{tpu_custom_call.1} parent=31 // pred_check_branch
          %268 = sbr.rel (%p266) target = $region36
        $region35: #{tpu_custom_call.1} parent=31 // pred_region
          %s269 = sand.u32 %s37, 1
          %s270 = scalar_lea.sflag [#allocation3], %s269
          %s271 = sand.u32 %s37, 1
          %s272 = smul.addr %s271, 8
          %s273 = scalar_lea.vmem [#allocation2], %s272
          %s275 = ssub.s32 128, 128
          %276 = vsyncadd %s270, %s275
          %s277 = smul.addr %s27, 128
          %s278 = scalar_lea.hbm %s0, %s277
          %s280 = sshll.u32 %s273, 4
          %s281 = int_to_ptr.vmem [resolvable:$true] %s280
          %283 = dma.hbm_to_vmem [thread:$0]  %s278, 128, %s281, %s270
        $region36: #{tpu_custom_call.1} parent=31 // pred_fallthru
          _
        // Predicated region
        $region37: #{tpu_custom_call.1} parent=31 // pred_check
          %p284 = pneg %p73
        $region38: #{tpu_custom_call.1} parent=31 // pred_check_branch
          %286 = sbr.rel (%p284) target = $region40
        $region39: #{tpu_custom_call.1} parent=31 // pred_region
          %s287 = sand.u32 %s27, 1
          %s288 = scalar_lea.sflag [#allocation6], %s287
          %s289 = sand.u32 %s63, 1
          %s290 = smul.addr %s289, 8
          %s291 = scalar_lea.vmem [#allocation5], %s290
          %s293 = ssub.s32 128, 128
          %294 = vsyncadd %s288, %s293
          %s295 = smul.addr %s27, 128
          %s296 = scalar_lea.hbm %s1, %s295
          %s298 = sshll.u32 %s291, 4
          %s299 = int_to_ptr.vmem [resolvable:$true] %s298
          %301 = dma.hbm_to_vmem [thread:$0]  %s296, 128, %s299, %s288
        $region40: #{tpu_custom_call.1} parent=31 // pred_fallthru
          _
      $region32: #{tpu_custom_call.1} parent=5 // pred_fallthru
        _
      %p302 = scmp.le.s32.totalorder 1, %s27
      %p303 = scmp.lt.s32.totalorder %s27, 3
      %p304 = pnand %p302, %p303
      %p305 = pneg %p304
      // Predicated region
      $region41: #{tpu_custom_call.1} parent=5 // pred_check
        _
      $region42: #{tpu_custom_call.1} parent=5 // pred_check_branch
        %307 = sbr.rel (%p304) target = $region44
      $region43: #{tpu_custom_call.1} parent=5 // pred_region
        %s308 = ssub.s32 %s27, 1
        %s309 = sand.u32 %s40, 1
        %s310 = scalar_lea.sflag [#allocation3], %s309
        %s311 = sand.u32 %s40, 1
        %s312 = smul.addr %s311, 8
        %s313 = scalar_lea.vmem [#allocation2], %s312
        // Predicated region
        $region45: #{tpu_custom_call.1} parent=43 // pred_check
          %p314 = pneg %p53
        $region46: #{tpu_custom_call.1} parent=43 // pred_check_branch
          %316 = sbr.rel (%p314) target = $region48
        $region47: #{tpu_custom_call.1} parent=43 // pred_region
          %317 = dma.done %s310, 128
        $region48: #{tpu_custom_call.1} parent=43 // pred_fallthru
          _
        %s318 = sand.u32 %s32, 1
        %s319 = scalar_lea.sflag [#allocation6], %s318
        %s320 = sand.u32 %s66, 1
        %s321 = smul.addr %s320, 8
        %s322 = scalar_lea.vmem [#allocation5], %s321
        // Predicated region
        $region49: #{tpu_custom_call.1} parent=43 // pred_check
          %p323 = pneg %p79
        $region50: #{tpu_custom_call.1} parent=43 // pred_check_branch
          %325 = sbr.rel (%p323) target = $region52
        $region51: #{tpu_custom_call.1} parent=43 // pred_region
          %326 = dma.done %s319, 128
        $region52: #{tpu_custom_call.1} parent=43 // pred_fallthru
          _
        // Predicated region
        $region53: #{tpu_custom_call.1} parent=43 // pred_check
          %p327 = pneg %p100
        $region54: #{tpu_custom_call.1} parent=43 // pred_check_branch
          %329 = sbr.rel (%p327) target = $region56
        $region55: #{tpu_custom_call.1} parent=43 // pred_region
          %330 = dma.done [#allocation6], 512
        $region56: #{tpu_custom_call.1} parent=43 // pred_fallthru
          _
        // Predicated region
        $region57: #{tpu_custom_call.1} parent=43 // pred_check
          %p331 = pneg %p142
        $region58: #{tpu_custom_call.1} parent=43 // pred_check_branch
          %333 = sbr.rel (%p331) target = $region60
        $region59: #{tpu_custom_call.1} parent=43 // pred_region
          %334 = dma.done [#allocation9], 512
        $region60: #{tpu_custom_call.1} parent=43 // pred_fallthru
          _
        %s335 = sand.u32 %s40, 1
        %s336 = scalar_lea.sflag [#allocation3], %s335
        %s337 = sand.u32 %s40, 1
        %s338 = smul.addr %s337, 8
        %s339 = scalar_lea.vmem [#allocation2], %s338
        %p340 = pneg %p53
        %p341 = pneg %p50
        %s342 = sand.u32 %s32, 1
        %s343 = scalar_lea.sflag [#allocation6], %s342
        %s344 = sand.u32 %s66, 1
        %s345 = smul.addr %s344, 8
        %s346 = scalar_lea.vmem [#allocation5], %s345
        %p347 = pneg %p79
        %p348 = pneg %p76
        %p349 = pneg %p100
        %p350 = pneg %p97
        %p351 = pneg %p121
        %p352 = pneg %p118
        %p353 = pneg %p142
        %p354 = pneg %p139
        %p355 = pneg %p163
        %p356 = pneg %p160
        %p357 = pneg %p189
        %p358 = pneg %p186
        %s359 = sand.u32 %s176, 1
        %s360 = scalar_lea.sflag [#allocation4], %s359
        %s361 = sand.u32 %s176, 1
        %s362 = smul.addr %s361, 8
        %s363 = scalar_lea.vmem [#allocation10], %s362
        %p364 = pneg %p215
        %p365 = pneg %p212
        %s366 = sand.u32 %s202, 1
        %s367 = scalar_lea.sflag [#allocation12], %s366
        %s368 = sand.u32 %s202, 1
        %s369 = smul.addr %s368, 8
        %s370 = scalar_lea.vmem [#allocation11], %s369
        %v371 = vld [vmem:[%s313] sm:$0xff]
        %v372 = vld [vmem:[%s322] sm:$0xff]
        %v373 = vld [vmem:[#allocation7] sm:$0xff]
        %v374 = vld [vmem:[#allocation7 + $0x8] sm:$0xff]
        %v375 = vld [vmem:[#allocation7 + $0x10] sm:$0xff]
        %v376 = vld [vmem:[#allocation7 + $0x18] sm:$0xff]
        %v377 = vld [vmem:[%s3] sm:$0x1]
        %v379 = vlaneseq
        %v380 = vshrl.u32 %v379, 7
        %v381 = vsub.s32 0, %v380
        %v382 = vrot.slane %v377, %v381
        %vm384 = vcmask 261120
        %v386 = vsel %vm384, %v371, 0
        %388 = vmatprep.subr.mxu0 0.0
        %389 = vmatpush1.msra.mxu0 %v373
        %390 = vmatprep.subr.mxu0 0.0
        %391 = vmatpush1.msra.mxu0 %v374
        %392 = vmatprep.subr.mxu0 0.0
        %393 = vmatpush1.msra.mxu0 %v375
        %394 = vmatprep.subr.mxu0 0.0
        %395 = vmatpush1.msra.mxu0 %v376
        %396 = vmatprep.subr.mxu0 0.0
        %397 = vmatpush1.msra.mxu0 0.0
        %398 = vmatprep.subr.mxu0 0.0
        %399 = vmatpush1.msra.mxu0 0.0
        %400 = vmatprep.subr.mxu0 0.0
        %401 = vmatpush1.msra.mxu0 0.0
        %402 = vmatprep.subr.mxu0 0.0
        %403 = vmatpush1.msra.mxu0 0.0
        %404 = vmatprep.subr.mxu0 0.0
        %405 = vmatpush1.msra.mxu0 0.0
        %406 = vmatprep.subr.mxu0 0.0
        %407 = vmatpush1.msra.mxu0 0.0
        %408 = vmatprep.subr.mxu0 0.0
        %409 = vmatpush1.msra.mxu0 0.0
        %410 = vmatprep.subr.mxu0 0.0
        %411 = vmatpush1.msra.mxu0 0.0
        %412 = vmatprep.subr.mxu0 0.0
        %413 = vmatpush1.msra.mxu0 0.0
        %414 = vmatprep.subr.mxu0 0.0
        %415 = vmatpush1.msra.mxu0 0.0
        %416 = vmatprep.subr.mxu0 0.0
        %417 = vmatpush1.msra.mxu0 0.0
        %418 = vmatprep.subr.mxu0 0.0
        %419 = vmatpush1.msra.mxu0 0.0
        %420 = vmatprep.subr.mxu0 0.0
        %421 = vmatpush1.msra.mxu0 0.0
        %422 = vmatprep.subr.mxu0 0.0
        %423 = vmatpush1.msra.mxu0 0.0
        %424 = vmatprep.subr.mxu0 0.0
        %425 = vmatpush1.msra.mxu0 0.0
        %426 = vmatprep.subr.mxu0 0.0
        %427 = vmatpush1.msra.mxu0 0.0
        %428 = vmatprep.subr.mxu0 0.0
        %429 = vmatpush1.msra.mxu0 0.0
        %430 = vmatprep.subr.mxu0 0.0
        %431 = vmatpush1.msra.mxu0 0.0
        %432 = vmatprep.subr.mxu0 0.0
        %433 = vmatpush1.msra.mxu0 0.0
        %434 = vmatprep.subr.mxu0 0.0
        %435 = vmatpush1.msra.mxu0 0.0
        %436 = vmatprep.subr.mxu0 0.0
        %437 = vmatpush1.msra.mxu0 0.0
        %438 = vmatprep.subr.mxu0 0.0
        %439 = vmatpush1.msra.mxu0 0.0
        %440 = vmatprep.subr.mxu0 0.0
        %441 = vmatpush1.msra.mxu0 0.0
        %442 = vmatprep.subr.mxu0 0.0
        %443 = vmatpush1.msra.mxu0 0.0
        %444 = vmatprep.subr.mxu0 0.0
        %445 = vmatpush1.msra.mxu0 0.0
        %446 = vmatprep.subr.mxu0 0.0
        %447 = vmatpush1.msra.mxu0 0.0
        %448 = vmatprep.subr.mxu0 0.0
        %449 = vmatpush1.msra.mxu0 0.0
        %450 = vmatprep.subr.mxu0 0.0
        %451 = vmatpush1.msra.mxu0 0.0
        %452 = vmatprep.mubr.f32.mxu0 0.0
        %453 = vmatmul.mubr.f32.gmra.mrb[0].mxu0 %v386
        %v454 = vpop.f32.mrb[0].mxu0
        %v455 = vadd.f32 %v382, %v454
        %v456 = vpop.f32.mrb[0].mxu0
        %457 = vdwg.mxu0
        %v458 = vld [vmem:[#allocation8] sm:$0xff]
        %v459 = vld [vmem:[#allocation8 + $0x8] sm:$0xff]
        %v460 = vld [vmem:[#allocation8 + $0x10] sm:$0xff]
        %v461 = vld [vmem:[#allocation8 + $0x18] sm:$0xff]
        %v462 = vld [vmem:[%s5] sm:$0x1]
        %v464 = vlaneseq
        %v465 = vshrl.u32 %v464, 7
        %v466 = vsub.s32 0, %v465
        %v467 = vrot.slane %v462, %v466
        %v470 = vsel %vm384, %v372, 0
        %472 = vmatprep.subr.mxu0 0.0
        %473 = vmatpush1.msra.mxu0 %v458
        %474 = vmatprep.subr.mxu0 0.0
        %475 = vmatpush1.msra.mxu0 %v459
        %476 = vmatprep.subr.mxu0 0.0
        %477 = vmatpush1.msra.mxu0 %v460
        %478 = vmatprep.subr.mxu0 0.0
        %479 = vmatpush1.msra.mxu0 %v461
        %480 = vmatprep.subr.mxu0 0.0
        %481 = vmatpush1.msra.mxu0 0.0
        %482 = vmatprep.subr.mxu0 0.0
        %483 = vmatpush1.msra.mxu0 0.0
        %484 = vmatprep.subr.mxu0 0.0
        %485 = vmatpush1.msra.mxu0 0.0
        %486 = vmatprep.subr.mxu0 0.0
        %487 = vmatpush1.msra.mxu0 0.0
        %488 = vmatprep.subr.mxu0 0.0
        %489 = vmatpush1.msra.mxu0 0.0
        %490 = vmatprep.subr.mxu0 0.0
        %491 = vmatpush1.msra.mxu0 0.0
        %492 = vmatprep.subr.mxu0 0.0
        %493 = vmatpush1.msra.mxu0 0.0
        %494 = vmatprep.subr.mxu0 0.0
        %495 = vmatpush1.msra.mxu0 0.0
        %496 = vmatprep.subr.mxu0 0.0
        %497 = vmatpush1.msra.mxu0 0.0
        %498 = vmatprep.subr.mxu0 0.0
        %499 = vmatpush1.msra.mxu0 0.0
        %500 = vmatprep.subr.mxu0 0.0
        %501 = vmatpush1.msra.mxu0 0.0
        %502 = vmatprep.subr.mxu0 0.0
        %503 = vmatpush1.msra.mxu0 0.0
        %504 = vmatprep.subr.mxu0 0.0
        %505 = vmatpush1.msra.mxu0 0.0
        %506 = vmatprep.subr.mxu0 0.0
        %507 = vmatpush1.msra.mxu0 0.0
        %508 = vmatprep.subr.mxu0 0.0
        %509 = vmatpush1.msra.mxu0 0.0
        %510 = vmatprep.subr.mxu0 0.0
        %511 = vmatpush1.msra.mxu0 0.0
        %512 = vmatprep.subr.mxu0 0.0
        %513 = vmatpush1.msra.mxu0 0.0
        %514 = vmatprep.subr.mxu0 0.0
        %515 = vmatpush1.msra.mxu0 0.0
        %516 = vmatprep.subr.mxu0 0.0
        %517 = vmatpush1.msra.mxu0 0.0
        %518 = vmatprep.subr.mxu0 0.0
        %519 = vmatpush1.msra.mxu0 0.0
        %520 = vmatprep.subr.mxu0 0.0
        %521 = vmatpush1.msra.mxu0 0.0
        %522 = vmatprep.subr.mxu0 0.0
        %523 = vmatpush1.msra.mxu0 0.0
        %524 = vmatprep.subr.mxu0 0.0
        %525 = vmatpush1.msra.mxu0 0.0
        %526 = vmatprep.subr.mxu0 0.0
        %527 = vmatpush1.msra.mxu0 0.0
        %528 = vmatprep.subr.mxu0 0.0
        %529 = vmatpush1.msra.mxu0 0.0
        %530 = vmatprep.subr.mxu0 0.0
        %531 = vmatpush1.msra.mxu0 0.0
        %532 = vmatprep.subr.mxu0 0.0
        %533 = vmatpush1.msra.mxu0 0.0
        %534 = vmatprep.subr.mxu0 0.0
        %535 = vmatpush1.msra.mxu0 0.0
        %536 = vmatprep.mubr.f32.mxu0 0.0
        %537 = vmatmul.mubr.f32.gmra.mrb[0].mxu0 %v470
        %v538 = vpop.f32.mrb[0].mxu0
        %v539 = vadd.f32 %v467, %v538
        %v540 = vpop.f32.mrb[0].mxu0
        %541 = vdwg.mxu0
        %v542 = vxor.u32 %v455, 2147483648
        %v543 = vmul.f32 %v542, 1.442695
        %v544 = vpow.pop %v543
        %v545 = vadd.f32 %v544, 1.0
        %v546 = vrcp.pop %v545
        %v547 = vmul.f32 1.0, %v546
        %v548 = vxor.u32 %v539, 2147483648
        %v549 = vmul.f32 %v548, 1.442695
        %v550 = vpow.pop %v549
        %v551 = vadd.f32 %v550, 1.0
        %v552 = vrcp.pop %v551
        %v553 = vmul.f32 1.0, %v552
        %555 = vrot.lane.b32.xlu0 %v539, 96
        %v556 = vpop.permute.xlu0 %555
        %v558 = vsel %vm384, %v455, 0
        %v560 = vsel %vm384, %v556, 0
        %562 = vmatprep.subr.mxu0 0.0
        %563 = vmatpush1.xpose.msra.mxu0 %v560
        %564 = vmatprep.subr.mxu0 0.0
        %565 = vmatpush1.xpose.msra.mxu0 0.0
        %566 = vmatprep.subr.mxu0 0.0
        %567 = vmatpush1.xpose.msra.mxu0 0.0
        %568 = vmatprep.subr.mxu0 0.0
        %569 = vmatpush1.xpose.msra.mxu0 0.0
        %570 = vmatprep.subr.mxu0 0.0
        %571 = vmatpush1.xpose.msra.mxu0 0.0
        %572 = vmatprep.subr.mxu0 0.0
        %573 = vmatpush1.xpose.msra.mxu0 0.0
        %574 = vmatprep.subr.mxu0 0.0
        %575 = vmatpush1.xpose.msra.mxu0 0.0
        %576 = vmatprep.subr.mxu0 0.0
        %577 = vmatpush1.xpose.msra.mxu0 0.0
        %578 = vmatprep.subr.mxu0 0.0
        %579 = vmatpush1.xpose.msra.mxu0 0.0
        %580 = vmatprep.subr.mxu0 0.0
        %581 = vmatpush1.xpose.msra.mxu0 0.0
        %582 = vmatprep.subr.mxu0 0.0
        %583 = vmatpush1.xpose.msra.mxu0 0.0
        %584 = vmatprep.subr.mxu0 0.0
        %585 = vmatpush1.xpose.msra.mxu0 0.0
        %586 = vmatprep.subr.mxu0 0.0
        %587 = vmatpush1.xpose.msra.mxu0 0.0
        %588 = vmatprep.subr.mxu0 0.0
        %589 = vmatpush1.xpose.msra.mxu0 0.0
        %590 = vmatprep.subr.mxu0 0.0
        %591 = vmatpush1.xpose.msra.mxu0 0.0
        %592 = vmatprep.subr.mxu0 0.0
        %593 = vmatpush1.xpose.msra.mxu0 0.0
        %594 = vmatprep.subr.mxu0 0.0
        %595 = vmatpush1.xpose.msra.mxu0 0.0
        %596 = vmatprep.subr.mxu0 0.0
        %597 = vmatpush1.xpose.msra.mxu0 0.0
        %598 = vmatprep.subr.mxu0 0.0
        %599 = vmatpush1.xpose.msra.mxu0 0.0
        %600 = vmatprep.subr.mxu0 0.0
        %601 = vmatpush1.xpose.msra.mxu0 0.0
        %602 = vmatprep.subr.mxu0 0.0
        %603 = vmatpush1.xpose.msra.mxu0 0.0
        %604 = vmatprep.subr.mxu0 0.0
        %605 = vmatpush1.xpose.msra.mxu0 0.0
        %606 = vmatprep.subr.mxu0 0.0
        %607 = vmatpush1.xpose.msra.mxu0 0.0
        %608 = vmatprep.subr.mxu0 0.0
        %609 = vmatpush1.xpose.msra.mxu0 0.0
        %610 = vmatprep.subr.mxu0 0.0
        %611 = vmatpush1.xpose.msra.mxu0 0.0
        %612 = vmatprep.subr.mxu0 0.0
        %613 = vmatpush1.xpose.msra.mxu0 0.0
        %614 = vmatprep.subr.mxu0 0.0
        %615 = vmatpush1.xpose.msra.mxu0 0.0
        %616 = vmatprep.subr.mxu0 0.0
        %617 = vmatpush1.xpose.msra.mxu0 0.0
        %618 = vmatprep.subr.mxu0 0.0
        %619 = vmatpush1.xpose.msra.mxu0 0.0
        %620 = vmatprep.subr.mxu0 0.0
        %621 = vmatpush1.xpose.msra.mxu0 0.0
        %622 = vmatprep.subr.mxu0 0.0
        %623 = vmatpush1.xpose.msra.mxu0 0.0
        %624 = vmatprep.subr.mxu0 0.0
        %625 = vmatpush1.xpose.msra.mxu0 0.0
        %626 = vmatprep.mubr.f32.mxu0 0.0
        %627 = vmatmul.mubr.f32.gmra.mrb[0].mxu0 %v558
        %v628 = vpop.f32.mrb[0].mxu0
        %v629 = vadd.f32 0.0, %v628
        %v630 = vpop.f32.mrb[0].mxu0
        %631 = vdwg.mxu0
        %vm632 = vcmask 64512
        %v633 = vsel %vm632, %v629, -inf
        %634 = vmax.xlane.f32.xlu0 %v633
        %v635 = vpop.xlane.xlu0 %634
        %v636 = vsub.f32 %v629, %v635
        %v637 = vmul.f32 %v636, 1.442695
        %v638 = vpow.pop %v637
        %v639 = vsel %vm632, %v638, 0.0
        %640 = vadd.xlane.f32.xlu0 %v639
        %v641 = vpop.xlane.xlu0 %640
        %v642 = vrcp.pop %v641
        %v643 = vmul.f32 %v638, %v642
        %644 = vrot.lane.b32.xlu0 %v539, 64
        %v645 = vpop.permute.xlu0 %644
        %v648 = vsel %vm632, %v643, 0
        %650 = vmatprep.subr.mxu0 0.0
        %651 = vmatpush1.msra.mxu0 %v645
        %652 = vmatprep.subr.mxu0 0.0
        %653 = vmatpush1.msra.mxu0 0.0
        %654 = vmatprep.subr.mxu0 0.0
        %655 = vmatpush1.msra.mxu0 0.0
        %656 = vmatprep.subr.mxu0 0.0
        %657 = vmatpush1.msra.mxu0 0.0
        %658 = vmatprep.subr.mxu0 0.0
        %659 = vmatpush1.msra.mxu0 0.0
        %660 = vmatprep.subr.mxu0 0.0
        %661 = vmatpush1.msra.mxu0 0.0
        %662 = vmatprep.subr.mxu0 0.0
        %663 = vmatpush1.msra.mxu0 0.0
        %664 = vmatprep.subr.mxu0 0.0
        %665 = vmatpush1.msra.mxu0 0.0
        %666 = vmatprep.subr.mxu0 0.0
        %667 = vmatpush1.msra.mxu0 0.0
        %668 = vmatprep.subr.mxu0 0.0
        %669 = vmatpush1.msra.mxu0 0.0
        %670 = vmatprep.subr.mxu0 0.0
        %671 = vmatpush1.msra.mxu0 0.0
        %672 = vmatprep.subr.mxu0 0.0
        %673 = vmatpush1.msra.mxu0 0.0
        %674 = vmatprep.subr.mxu0 0.0
        %675 = vmatpush1.msra.mxu0 0.0
        %676 = vmatprep.subr.mxu0 0.0
        %677 = vmatpush1.msra.mxu0 0.0
        %678 = vmatprep.subr.mxu0 0.0
        %679 = vmatpush1.msra.mxu0 0.0
        %680 = vmatprep.subr.mxu0 0.0
        %681 = vmatpush1.msra.mxu0 0.0
        %682 = vmatprep.subr.mxu0 0.0
        %683 = vmatpush1.msra.mxu0 0.0
        %684 = vmatprep.subr.mxu0 0.0
        %685 = vmatpush1.msra.mxu0 0.0
        %686 = vmatprep.subr.mxu0 0.0
        %687 = vmatpush1.msra.mxu0 0.0
        %688 = vmatprep.subr.mxu0 0.0
        %689 = vmatpush1.msra.mxu0 0.0
        %690 = vmatprep.subr.mxu0 0.0
        %691 = vmatpush1.msra.mxu0 0.0
        %692 = vmatprep.subr.mxu0 0.0
        %693 = vmatpush1.msra.mxu0 0.0
        %694 = vmatprep.subr.mxu0 0.0
        %695 = vmatpush1.msra.mxu0 0.0
        %696 = vmatprep.subr.mxu0 0.0
        %697 = vmatpush1.msra.mxu0 0.0
        %698 = vmatprep.subr.mxu0 0.0
        %699 = vmatpush1.msra.mxu0 0.0
        %700 = vmatprep.subr.mxu0 0.0
        %701 = vmatpush1.msra.mxu0 0.0
        %702 = vmatprep.subr.mxu0 0.0
        %703 = vmatpush1.msra.mxu0 0.0
        %704 = vmatprep.subr.mxu0 0.0
        %705 = vmatpush1.msra.mxu0 0.0
        %706 = vmatprep.subr.mxu0 0.0
        %707 = vmatpush1.msra.mxu0 0.0
        %708 = vmatprep.subr.mxu0 0.0
        %709 = vmatpush1.msra.mxu0 0.0
        %710 = vmatprep.subr.mxu0 0.0
        %711 = vmatpush1.msra.mxu0 0.0
        %712 = vmatprep.subr.mxu0 0.0
        %713 = vmatpush1.msra.mxu0 0.0
        %714 = vmatprep.mubr.f32.mxu0 0.0
        %715 = vmatmul.mubr.f32.gmra.mrb[0].mxu0 %v648
        %v716 = vpop.f32.mrb[0].mxu0
        %v717 = vadd.f32 0.0, %v716
        %v718 = vpop.f32.mrb[0].mxu0
        %719 = vdwg.mxu0
        %720 = vrot.lane.b32.xlu0 %v455, 96
        %v721 = vpop.permute.xlu0 %720
        %v722 = vsel %vm384, %v539, 0
        %v724 = vsel %vm384, %v721, 0
        %726 = vmatprep.subr.mxu0 0.0
        %727 = vmatpush1.xpose.msra.mxu0 %v724
        %728 = vmatprep.subr.mxu0 0.0
        %729 = vmatpush1.xpose.msra.mxu0 0.0
        %730 = vmatprep.subr.mxu0 0.0
        %731 = vmatpush1.xpose.msra.mxu0 0.0
        %732 = vmatprep.subr.mxu0 0.0
        %733 = vmatpush1.xpose.msra.mxu0 0.0
        %734 = vmatprep.subr.mxu0 0.0
        %735 = vmatpush1.xpose.msra.mxu0 0.0
        %736 = vmatprep.subr.mxu0 0.0
        %737 = vmatpush1.xpose.msra.mxu0 0.0
        %738 = vmatprep.subr.mxu0 0.0
        %739 = vmatpush1.xpose.msra.mxu0 0.0
        %740 = vmatprep.subr.mxu0 0.0
        %741 = vmatpush1.xpose.msra.mxu0 0.0
        %742 = vmatprep.subr.mxu0 0.0
        %743 = vmatpush1.xpose.msra.mxu0 0.0
        %744 = vmatprep.subr.mxu0 0.0
        %745 = vmatpush1.xpose.msra.mxu0 0.0
        %746 = vmatprep.subr.mxu0 0.0
        %747 = vmatpush1.xpose.msra.mxu0 0.0
        %748 = vmatprep.subr.mxu0 0.0
        %749 = vmatpush1.xpose.msra.mxu0 0.0
        %750 = vmatprep.subr.mxu0 0.0
        %751 = vmatpush1.xpose.msra.mxu0 0.0
        %752 = vmatprep.subr.mxu0 0.0
        %753 = vmatpush1.xpose.msra.mxu0 0.0
        %754 = vmatprep.subr.mxu0 0.0
        %755 = vmatpush1.xpose.msra.mxu0 0.0
        %756 = vmatprep.subr.mxu0 0.0
        %757 = vmatpush1.xpose.msra.mxu0 0.0
        %758 = vmatprep.subr.mxu0 0.0
        %759 = vmatpush1.xpose.msra.mxu0 0.0
        %760 = vmatprep.subr.mxu0 0.0
        %761 = vmatpush1.xpose.msra.mxu0 0.0
        %762 = vmatprep.subr.mxu0 0.0
        %763 = vmatpush1.xpose.msra.mxu0 0.0
        %764 = vmatprep.subr.mxu0 0.0
        %765 = vmatpush1.xpose.msra.mxu0 0.0
        %766 = vmatprep.subr.mxu0 0.0
        %767 = vmatpush1.xpose.msra.mxu0 0.0
        %768 = vmatprep.subr.mxu0 0.0
        %769 = vmatpush1.xpose.msra.mxu0 0.0
        %770 = vmatprep.subr.mxu0 0.0
        %771 = vmatpush1.xpose.msra.mxu0 0.0
        %772 = vmatprep.subr.mxu0 0.0
        %773 = vmatpush1.xpose.msra.mxu0 0.0
        %774 = vmatprep.subr.mxu0 0.0
        %775 = vmatpush1.xpose.msra.mxu0 0.0
        %776 = vmatprep.subr.mxu0 0.0
        %777 = vmatpush1.xpose.msra.mxu0 0.0
        %778 = vmatprep.subr.mxu0 0.0
        %779 = vmatpush1.xpose.msra.mxu0 0.0
        %780 = vmatprep.subr.mxu0 0.0
        %781 = vmatpush1.xpose.msra.mxu0 0.0
        %782 = vmatprep.subr.mxu0 0.0
        %783 = vmatpush1.xpose.msra.mxu0 0.0
        %784 = vmatprep.subr.mxu0 0.0
        %785 = vmatpush1.xpose.msra.mxu0 0.0
        %786 = vmatprep.subr.mxu0 0.0
        %787 = vmatpush1.xpose.msra.mxu0 0.0
        %788 = vmatprep.subr.mxu0 0.0
        %789 = vmatpush1.xpose.msra.mxu0 0.0
        %790 = vmatprep.mubr.f32.mxu0 0.0
        %791 = vmatmul.mubr.f32.gmra.mrb[0].mxu0 %v722
        %v792 = vpop.f32.mrb[0].mxu0
        %v793 = vadd.f32 0.0, %v792
        %v794 = vpop.f32.mrb[0].mxu0
        %795 = vdwg.mxu0
        %v796 = vsel %vm632, %v793, -inf
        %797 = vmax.xlane.f32.xlu0 %v796
        %v798 = vpop.xlane.xlu0 %797
        %v799 = vsub.f32 %v793, %v798
        %v800 = vmul.f32 %v799, 1.442695
        %v801 = vpow.pop %v800
        %v802 = vsel %vm632, %v801, 0.0
        %803 = vadd.xlane.f32.xlu0 %v802
        %v804 = vpop.xlane.xlu0 %803
        %v805 = vrcp.pop %v804
        %v806 = vmul.f32 %v801, %v805
        %807 = vrot.lane.b32.xlu0 %v455, 64
        %v808 = vpop.permute.xlu0 %807
        %v811 = vsel %vm632, %v806, 0
        %813 = vmatprep.subr.mxu0 0.0
        %814 = vmatpush1.msra.mxu0 %v808
        %815 = vmatprep.subr.mxu0 0.0
        %816 = vmatpush1.msra.mxu0 0.0
        %817 = vmatprep.subr.mxu0 0.0
        %818 = vmatpush1.msra.mxu0 0.0
        %819 = vmatprep.subr.mxu0 0.0
        %820 = vmatpush1.msra.mxu0 0.0
        %821 = vmatprep.subr.mxu0 0.0
        %822 = vmatpush1.msra.mxu0 0.0
        %823 = vmatprep.subr.mxu0 0.0
        %824 = vmatpush1.msra.mxu0 0.0
        %825 = vmatprep.subr.mxu0 0.0
        %826 = vmatpush1.msra.mxu0 0.0
        %827 = vmatprep.subr.mxu0 0.0
        %828 = vmatpush1.msra.mxu0 0.0
        %829 = vmatprep.subr.mxu0 0.0
        %830 = vmatpush1.msra.mxu0 0.0
        %831 = vmatprep.subr.mxu0 0.0
        %832 = vmatpush1.msra.mxu0 0.0
        %833 = vmatprep.subr.mxu0 0.0
        %834 = vmatpush1.msra.mxu0 0.0
        %835 = vmatprep.subr.mxu0 0.0
        %836 = vmatpush1.msra.mxu0 0.0
        %837 = vmatprep.subr.mxu0 0.0
        %838 = vmatpush1.msra.mxu0 0.0
        %839 = vmatprep.subr.mxu0 0.0
        %840 = vmatpush1.msra.mxu0 0.0
        %841 = vmatprep.subr.mxu0 0.0
        %842 = vmatpush1.msra.mxu0 0.0
        %843 = vmatprep.subr.mxu0 0.0
        %844 = vmatpush1.msra.mxu0 0.0
        %845 = vmatprep.subr.mxu0 0.0
        %846 = vmatpush1.msra.mxu0 0.0
        %847 = vmatprep.subr.mxu0 0.0
        %848 = vmatpush1.msra.mxu0 0.0
        %849 = vmatprep.subr.mxu0 0.0
        %850 = vmatpush1.msra.mxu0 0.0
        %851 = vmatprep.subr.mxu0 0.0
        %852 = vmatpush1.msra.mxu0 0.0
        %853 = vmatprep.subr.mxu0 0.0
        %854 = vmatpush1.msra.mxu0 0.0
        %855 = vmatprep.subr.mxu0 0.0
        %856 = vmatpush1.msra.mxu0 0.0
        %857 = vmatprep.subr.mxu0 0.0
        %858 = vmatpush1.msra.mxu0 0.0
        %859 = vmatprep.subr.mxu0 0.0
        %860 = vmatpush1.msra.mxu0 0.0
        %861 = vmatprep.subr.mxu0 0.0
        %862 = vmatpush1.msra.mxu0 0.0
        %863 = vmatprep.subr.mxu0 0.0
        %864 = vmatpush1.msra.mxu0 0.0
        %865 = vmatprep.subr.mxu0 0.0
        %866 = vmatpush1.msra.mxu0 0.0
        %867 = vmatprep.subr.mxu0 0.0
        %868 = vmatpush1.msra.mxu0 0.0
        %869 = vmatprep.subr.mxu0 0.0
        %870 = vmatpush1.msra.mxu0 0.0
        %871 = vmatprep.subr.mxu0 0.0
        %872 = vmatpush1.msra.mxu0 0.0
        %873 = vmatprep.subr.mxu0 0.0
        %874 = vmatpush1.msra.mxu0 0.0
        %875 = vmatprep.subr.mxu0 0.0
        %876 = vmatpush1.msra.mxu0 0.0
        %877 = vmatprep.mubr.f32.mxu0 0.0
        %878 = vmatmul.mubr.f32.gmra.mrb[0].mxu0 %v811
        %v879 = vpop.f32.mrb[0].mxu0
        %v880 = vadd.f32 0.0, %v879
        %v881 = vpop.f32.mrb[0].mxu0
        %882 = vdwg.mxu0
        %884 = vrot.lane.b32.xlu0 %v717, 96
        %v885 = vpop.permute.xlu0 %884
        %v887 = vmul.f32 %v547, %v885
        %889 = vrot.lane.b32.xlu0 %v887, 32
        %v890 = vpop.permute.xlu0 %889
        %v892 = vadd.f32 %v371, %v890
        %893 = vst.msk [vmem:[%s363] sm:$0xff] %vm384, %v892
        %895 = vrot.lane.b32.xlu0 %v880, 96
        %v896 = vpop.permute.xlu0 %895
        %v898 = vmul.f32 %v553, %v896
        %900 = vrot.lane.b32.xlu0 %v898, 32
        %v901 = vpop.permute.xlu0 %900
        %v903 = vadd.f32 %v372, %v901
        %904 = vst.msk [vmem:[%s370] sm:$0xff] %vm384, %v903
        %s905 = sand.u32 %s176, 1
        %s906 = scalar_lea.sflag [#allocation4], %s905
        %s907 = sand.u32 %s176, 1
        %s908 = smul.addr %s907, 8
        %s909 = scalar_lea.vmem [#allocation10], %s908
        %s910 = sand.u32 %s202, 1
        %s911 = scalar_lea.sflag [#allocation12], %s910
        %s912 = sand.u32 %s202, 1
        %s913 = smul.addr %s912, 8
        %s914 = scalar_lea.vmem [#allocation11], %s913
        // Predicated region
        $region61: #{tpu_custom_call.1} parent=43 // pred_check
          %p915 = pneg %p186
        $region62: #{tpu_custom_call.1} parent=43 // pred_check_branch
          %917 = sbr.rel (%p915) target = $region64
        $region63: #{tpu_custom_call.1} parent=43 // pred_region
          %s919 = ssub.s32 128, 128
          %920 = vsyncadd %s906, %s919
          %s921 = smul.addr %s32, 128
          %s922 = scalar_lea.hbm %s6, %s921
          %s924 = sshll.u32 %s909, 4
          %s925 = int_to_ptr.vmem [resolvable:$true] %s924
          %927 = dma.vmem_to_hbm [thread:$0]  %s925, 128, %s922, %s906
        $region64: #{tpu_custom_call.1} parent=43 // pred_fallthru
          _
        // Predicated region
        $region65: #{tpu_custom_call.1} parent=43 // pred_check
          %p928 = pneg %p212
        $region66: #{tpu_custom_call.1} parent=43 // pred_check_branch
          %930 = sbr.rel (%p928) target = $region68
        $region67: #{tpu_custom_call.1} parent=43 // pred_region
          %s932 = ssub.s32 128, 128
          %933 = vsyncadd %s911, %s932
          %s934 = smul.addr %s32, 128
          %s935 = scalar_lea.hbm %s7, %s934
          %s937 = sshll.u32 %s914, 4
          %s938 = int_to_ptr.vmem [resolvable:$true] %s937
          %940 = dma.vmem_to_hbm [thread:$0]  %s938, 128, %s935, %s911
        $region68: #{tpu_custom_call.1} parent=43 // pred_fallthru
          _
      $region44: #{tpu_custom_call.1} parent=5 // pred_fallthru
        _
      %p941 = scmp.le.s32.totalorder 2, %s27
      // Predicated region
      $region69: #{tpu_custom_call.1} parent=5 // pred_check
        %p942 = pneg %p941
      $region70: #{tpu_custom_call.1} parent=5 // pred_check_branch
        %944 = sbr.rel (%p942) target = $region72
      $region71: #{tpu_custom_call.1} parent=5 // pred_region
        %s945 = ssub.s32 %s27, 2
        // Predicated region
        $region73: #{tpu_custom_call.1} parent=71 // pred_check
          %p946 = pneg %p192
        $region74: #{tpu_custom_call.1} parent=71 // pred_check_branch
          %948 = sbr.rel (%p946) target = $region76
        $region75: #{tpu_custom_call.1} parent=71 // pred_region
          %s949 = sand.u32 %s177, 1
          %s950 = scalar_lea.sflag [#allocation4], %s949
          %s951 = sand.u32 %s177, 1
          %s952 = smul.addr %s951, 8
          %s953 = scalar_lea.vmem [#allocation10], %s952
          %954 = dma.done %s950, 128
        $region76: #{tpu_custom_call.1} parent=71 // pred_fallthru
          _
        // Predicated region
        $region77: #{tpu_custom_call.1} parent=71 // pred_check
          %p955 = pneg %p218
        $region78: #{tpu_custom_call.1} parent=71 // pred_check_branch
          %957 = sbr.rel (%p955) target = $region80
        $region79: #{tpu_custom_call.1} parent=71 // pred_region
          %s958 = sand.u32 %s203, 1
          %s959 = scalar_lea.sflag [#allocation12], %s958
          %s960 = sand.u32 %s203, 1
          %s961 = smul.addr %s960, 8
          %s962 = scalar_lea.vmem [#allocation11], %s961
          %963 = dma.done %s959, 128
        $region80: #{tpu_custom_call.1} parent=71 // pred_fallthru
          _
      $region72: #{tpu_custom_call.1} parent=5 // pred_fallthru
        _
    $region6: #{tpu_custom_call.1} parent=1 // loop_footer
      %s31 = sadd.s32 1, %s27
    $region7: #{tpu_custom_call.1} parent=1 // loop_footer_branch
      %26 = sbr.rel target = $region3
    $region8: #{tpu_custom_call.1} parent=1 // loop_exit
      _
    %964 = vsyncpa [#allocation3], 1
    %s965 = scalar_lea.sflag [#allocation3], 1
    %966 = vsyncpa %s965, 1
    %967 = vsyncpa [#allocation6], 1
    %s968 = scalar_lea.sflag [#allocation6], 1
    %969 = vsyncpa %s968, 1
    %970 = vsyncpa [#allocation9], 1
    %971 = vsyncpa [#allocation4], 1
    %s972 = scalar_lea.sflag [#allocation4], 1
    %973 = vsyncpa %s972, 1
    %974 = vsyncpa [#allocation12], 1
    %s975 = scalar_lea.sflag [#allocation12], 1
    %976 = vsyncpa %s975, 1

// kernel: tpu_custom_call.1
$region0: #{tpu_custom_call.1}
  #allocation0 [shape = 'u32[]', space=smem, size = 0x4, offset = 0x4, fixed_abs, tag = 'smem constant byte address 0x4 - core index']
  #allocation1 [shape = 'u32[144,128]{1,0:T(1,128)}', space=vmem, size = 0x12000, scoped, tag = 'internal scratch']
  %s0 = inlined_call_operand.hbm [shape: f32[2,8,32], index: 0, kind: input, shape index: {}]
  %s1 = inlined_call_operand.hbm [shape: f32[2,8,32], index: 1, kind: input, shape index: {}]
  %s2 = inlined_call_operand.hbm [shape: f32[32,128], index: 2, kind: input, shape index: {}]
  %s3 = inlined_call_operand.vmem [shape: f32[1,128], index: 3, kind: input, shape index: {}]
  %s4 = inlined_call_operand.hbm [shape: f32[32,128], index: 4, kind: input, shape index: {}]
  %s5 = inlined_call_operand.vmem [shape: f32[1,128], index: 5, kind: input, shape index: {}]
  %s6 = inlined_call_operand.hbm [shape: f32[2,8,32], index: 6, kind: output, shape index: {0}]
  %s7 = inlined_call_operand.hbm [shape: f32[2,8,32], index: 7, kind: output, shape index: {1}]
  %8 = xla_tuple %s6, %s7
  %s9 = sld [smem:[#allocation0]]
  $region81: #{tpu_custom_call.1} parent=0
    _
  %s11 = ssub.s32 1, %s9
  %s12 = scalar_select 0, %s11, %s9
  $region1: #{tpu_custom_call.1} parent=0
    #allocation2 [shape = 'u8[8192]{0}', space=vmem, size = 0x2000, scoped, tag = 'input window, operand 0']
    #allocation3 [shape = 's32[2]{0}', space=sflag, size = 0x8, scoped, tag = 'scoped memory for tpu_custom_call.1']
    #allocation4 [shape = 's32[2]{0}', space=sflag, size = 0x8, scoped, tag = 'scoped memory for tpu_custom_call.1']
    #allocation5 [shape = 'u8[8192]{0}', space=vmem, size = 0x2000, scoped, tag = 'input window, operand 1']
    #allocation6 [shape = 's32[2]{0}', space=sflag, size = 0x8, scoped, tag = 'scoped memory for tpu_custom_call.1']
    #allocation7 [shape = 'u8[16384]{0}', space=vmem, size = 0x4000, scoped, tag = 'input window, operand 2, single buffered']
    #allocation8 [shape = 'u8[16384]{0}', space=vmem, size = 0x4000, scoped, tag = 'input window, operand 4, single buffered']
    #allocation9 [shape = 's32[1]{0}', space=sflag, size = 0x4, scoped, tag = 'scoped memory for tpu_custom_call.1']
    #allocation10 [shape = 'u8[8192]{0}', space=vmem, size = 0x2000, scoped, tag = 'output window, operand 0']
    #allocation11 [shape = 'u8[8192]{0}', space=vmem, size = 0x2000, scoped, tag = 'output window, operand 1']
    #allocation12 [shape = 's32[2]{0}', space=sflag, size = 0x8, scoped, tag = 'scoped memory for tpu_custom_call.1']
    %13 = vsyncpa [#allocation3], 0
    %s14 = scalar_lea.sflag [#allocation3], 1
    %15 = vsyncpa %s14, 0
    %16 = vsyncpa [#allocation6], 0
    %s17 = scalar_lea.sflag [#allocation6], 1
    %18 = vsyncpa %s17, 0
    %19 = vsyncpa [#allocation9], 0
    %20 = vsyncpa [#allocation4], 0
    %s21 = scalar_lea.sflag [#allocation4], 1
    %22 = vsyncpa %s21, 0
    %23 = vsyncpa [#allocation12], 0
    %s24 = scalar_lea.sflag [#allocation12], 1
    %25 = vsyncpa %s24, 0
    loop: start=0, step=1, limit=4
    $region2: #{tpu_custom_call.1} parent=1 // loop_pre_header
      _
    $region3: #{tpu_custom_call.1} parent=1 // loop_header
      %s27 = sphi 0, %s31
      %p28 = scmp.ge.s32.totalorder %s27, 4
      %s37 = sphi 0, %s39
      %s40 = sphi 0, %s37
      %s41 = sphi 0, %s40
      %s57 = sphi 0, %s41
      %s63 = sphi 0, %s65
      %s66 = sphi 0, %s63
      %s67 = sphi 0, %s66
      %s83 = sphi 0, %s67
      %s87 = sphi 0, %s87
      %s89 = sphi 0, %s87
      %s90 = sphi 0, %s89
      %s104 = sphi 0, %s90
      %s108 = sphi 0, %s108
      %s110 = sphi 0, %s108
      %s111 = sphi 0, %s110
      %s125 = sphi 0, %s111
      %s129 = sphi 0, %s129
      %s131 = sphi 0, %s129
      %s132 = sphi 0, %s131
      %s146 = sphi 0, %s132
      %s150 = sphi 0, %s150
      %s152 = sphi 0, %s150
      %s153 = sphi 0, %s152
      %s167 = sphi 0, %s153
      %s173 = sphi 0, %s175
      %s176 = sphi 0, %s173
      %s177 = sphi 0, %s176
      %s193 = sphi 0, %s177
      %s199 = sphi 0, %s201
      %s202 = sphi 0, %s199
      %s203 = sphi 0, %s202
      %s219 = sphi 0, %s203
    $region4: #{tpu_custom_call.1} parent=1 // loop_header_branch
      %30 = sbr.rel (%p28) target = $region8
    $region5: #{tpu_custom_call.1} parent=1 // loop_body
      %s32 = ssub.s32 %s27, 1
      %s33 = ssub.s32 %s27, 2
      %s34 = sadd.s32 %s27, 1
      %s35 = ssub.s32 %s27, %s34
      %p36 = scmp.eq.s32.totalorder %s35, 0
      %s38 = sadd.s32 %s37, 1
      %s39 = scalar_select %p36, %s37, %s38
      %p42 = pneg %p36
      %p43 = scmp.eq.s32.totalorder %s27, 1
      %p44 = por %p42, %p43
      %p45 = scmp.ne.s32.totalorder %s37, %s40
      %p46 = scmp.eq.s32.totalorder %s27, 0
      %p47 = por %p45, %p46
      %p48 = scmp.ne.s32.totalorder %s37, %s40
      %p49 = scmp.eq.s32.totalorder %s32, 1
      %p50 = por %p48, %p49
      %p51 = scmp.ne.s32.totalorder %s40, %s41
      %p52 = scmp.eq.s32.totalorder %s32, 0
      %p53 = por %p51, %p52
      %p54 = scmp.ne.s32.totalorder %s40, %s41
      %p55 = scmp.eq.s32.totalorder %s33, 1
      %p56 = por %p54, %p55
      %p58 = scmp.ne.s32.totalorder %s41, %s57
      %p59 = scmp.eq.s32.totalorder %s33, 0
      %p60 = por %p58, %p59
      %s61 = ssub.s32 %s27, %s34
      %p62 = scmp.eq.s32.totalorder %s61, 0
      %s64 = sadd.s32 %s63, 1
      %s65 = scalar_select %p62, %s63, %s64
      %p68 = pneg %p62
      %p69 = scmp.eq.s32.totalorder %s27, 1
      %p70 = por %p68, %p69
      %p71 = scmp.ne.s32.totalorder %s63, %s66
      %p72 = scmp.eq.s32.totalorder %s27, 0
      %p73 = por %p71, %p72
      %p74 = scmp.ne.s32.totalorder %s63, %s66
      %p75 = scmp.eq.s32.totalorder %s32, 1
      %p76 = por %p74, %p75
      %p77 = scmp.ne.s32.totalorder %s66, %s67
      %p78 = scmp.eq.s32.totalorder %s32, 0
      %p79 = por %p77, %p78
      %p80 = scmp.ne.s32.totalorder %s66, %s67
      %p81 = scmp.eq.s32.totalorder %s33, 1
      %p82 = por %p80, %p81
      %p84 = scmp.ne.s32.totalorder %s67, %s83
      %p85 = scmp.eq.s32.totalorder %s33, 0
      %p86 = por %p84, %p85
      %s88 = sadd.s32 %s87, 1
      %p91 = scmp.eq.s32.totalorder %s27, 1
      %p92 = scmp.ne.s32.totalorder %s87, %s89
      %p93 = scmp.eq.s32.totalorder %s27, 0
      %p94 = por %p92, %p93
      %p95 = scmp.ne.s32.totalorder %s87, %s89
      %p96 = scmp.eq.s32.totalorder %s32, 1
      %p97 = por %p95, %p96
      %p98 = scmp.ne.s32.totalorder %s89, %s90
      %p99 = scmp.eq.s32.totalorder %s32, 0
      %p100 = por %p98, %p99
      %p101 = scmp.ne.s32.totalorder %s89, %s90
      %p102 = scmp.eq.s32.totalorder %s33, 1
      %p103 = por %p101, %p102
      %p105 = scmp.ne.s32.totalorder %s90, %s104
      %p106 = scmp.eq.s32.totalorder %s33, 0
      %p107 = por %p105, %p106
      %s109 = sadd.s32 %s108, 1
      %p112 = scmp.eq.s32.totalorder %s27, 1
      %p113 = scmp.ne.s32.totalorder %s108, %s110
      %p114 = scmp.eq.s32.totalorder %s27, 0
      %p115 = por %p113, %p114
      %p116 = scmp.ne.s32.totalorder %s108, %s110
      %p117 = scmp.eq.s32.totalorder %s32, 1
      %p118 = por %p116, %p117
      %p119 = scmp.ne.s32.totalorder %s110, %s111
      %p120 = scmp.eq.s32.totalorder %s32, 0
      %p121 = por %p119, %p120
      %p122 = scmp.ne.s32.totalorder %s110, %s111
      %p123 = scmp.eq.s32.totalorder %s33, 1
      %p124 = por %p122, %p123
      %p126 = scmp.ne.s32.totalorder %s111, %s125
      %p127 = scmp.eq.s32.totalorder %s33, 0
      %p128 = por %p126, %p127
      %s130 = sadd.s32 %s129, 1
      %p133 = scmp.eq.s32.totalorder %s27, 1
      %p134 = scmp.ne.s32.totalorder %s129, %s131
      %p135 = scmp.eq.s32.totalorder %s27, 0
      %p136 = por %p134, %p135
      %p137 = scmp.ne.s32.totalorder %s129, %s131
      %p138 = scmp.eq.s32.totalorder %s32, 1
      %p139 = por %p137, %p138
      %p140 = scmp.ne.s32.totalorder %s131, %s132
      %p141 = scmp.eq.s32.totalorder %s32, 0
      %p142 = por %p140, %p141
      %p143 = scmp.ne.s32.totalorder %s131, %s132
      %p144 = scmp.eq.s32.totalorder %s33, 1
      %p145 = por %p143, %p144
      %p147 = scmp.ne.s32.totalorder %s132, %s146
      %p148 = scmp.eq.s32.totalorder %s33, 0
      %p149 = por %p147, %p148
      %s151 = sadd.s32 %s150, 1
      %p154 = scmp.eq.s32.totalorder %s27, 1
      %p155 = scmp.ne.s32.totalorder %s150, %s152
      %p156 = scmp.eq.s32.totalorder %s27, 0
      %p157 = por %p155, %p156
      %p158 = scmp.ne.s32.totalorder %s150, %s152
      %p159 = scmp.eq.s32.totalorder %s32, 1
      %p160 = por %p158, %p159
      %p161 = scmp.ne.s32.totalorder %s152, %s153
      %p162 = scmp.eq.s32.totalorder %s32, 0
      %p163 = por %p161, %p162
      %p164 = scmp.ne.s32.totalorder %s152, %s153
      %p165 = scmp.eq.s32.totalorder %s33, 1
      %p166 = por %p164, %p165
      %p168 = scmp.ne.s32.totalorder %s153, %s167
      %p169 = scmp.eq.s32.totalorder %s33, 0
      %p170 = por %p168, %p169
      %s171 = ssub.s32 %s27, %s34
      %p172 = scmp.eq.s32.totalorder %s171, 0
      %s174 = sadd.s32 %s173, 1
      %s175 = scalar_select %p172, %s173, %s174
      %p178 = pneg %p172
      %p179 = scmp.eq.s32.totalorder %s27, 1
      %p180 = por %p178, %p179
      %p181 = scmp.ne.s32.totalorder %s173, %s176
      %p182 = scmp.eq.s32.totalorder %s27, 0
      %p183 = por %p181, %p182
      %p184 = scmp.ne.s32.totalorder %s173, %s176
      %p185 = scmp.eq.s32.totalorder %s32, 1
      %p186 = por %p184, %p185
      %p187 = scmp.ne.s32.totalorder %s176, %s177
      %p188 = scmp.eq.s32.totalorder %s32, 0
      %p189 = por %p187, %p188
      %p190 = scmp.ne.s32.totalorder %s176, %s177
      %p191 = scmp.eq.s32.totalorder %s33, 1
      %p192 = por %p190, %p191
      %p194 = scmp.ne.s32.totalorder %s177, %s193
      %p195 = scmp.eq.s32.totalorder %s33, 0
      %p196 = por %p194, %p195
      %s197 = ssub.s32 %s27, %s34
      %p198 = scmp.eq.s32.totalorder %s197, 0
      %s200 = sadd.s32 %s199, 1
      %s201 = scalar_select %p198, %s199, %s200
      %p204 = pneg %p198
      %p205 = scmp.eq.s32.totalorder %s27, 1
      %p206 = por %p204, %p205
      %p207 = scmp.ne.s32.totalorder %s199, %s202
      %p208 = scmp.eq.s32.totalorder %s27, 0
      %p209 = por %p207, %p208
      %p210 = scmp.ne.s32.totalorder %s199, %s202
      %p211 = scmp.eq.s32.totalorder %s32, 1
      %p212 = por %p210, %p211
      %p213 = scmp.ne.s32.totalorder %s202, %s203
      %p214 = scmp.eq.s32.totalorder %s32, 0
      %p215 = por %p213, %p214
      %p216 = scmp.ne.s32.totalorder %s202, %s203
      %p217 = scmp.eq.s32.totalorder %s33, 1
      %p218 = por %p216, %p217
      %p220 = scmp.ne.s32.totalorder %s203, %s219
      %p221 = scmp.eq.s32.totalorder %s33, 0
      %p222 = por %p220, %p221
      %p223 = scmp.le.s32.totalorder 1, %s27
      %p224 = scmp.lt.s32.totalorder %s27, 3
      %p225 = pnand %p223, %p224
      %p226 = pneg %p225
      // Predicated region
      $region9: #{tpu_custom_call.1} parent=5 // pred_check
        _
      $region10: #{tpu_custom_call.1} parent=5 // pred_check_branch
        %228 = sbr.rel (%p225) target = $region12
      $region11: #{tpu_custom_call.1} parent=5 // pred_region
        %s229 = ssub.s32 %s27, 1
        // Predicated region
        $region13: #{tpu_custom_call.1} parent=11 // pred_check
          %p230 = pneg %p100
        $region14: #{tpu_custom_call.1} parent=11 // pred_check_branch
          %232 = sbr.rel (%p230) target = $region16
        $region15: #{tpu_custom_call.1} parent=11 // pred_region
          %s234 = ssub.s32 512, 512
          %235 = vsyncadd [#allocation6], %s234
          %s236 = sshll.u32 [#allocation7], 4
          %s237 = int_to_ptr.vmem [resolvable:$true] %s236
          %242 = dma.hbm_to_vmem [thread:$0]  %s2, 512, %s237, [#allocation6], 128, 128, 8
        $region16: #{tpu_custom_call.1} parent=11 // pred_fallthru
          _
        // Predicated region
        $region17: #{tpu_custom_call.1} parent=11 // pred_check
          %p243 = pneg %p121
        $region18: #{tpu_custom_call.1} parent=11 // pred_check_branch
          %245 = sbr.rel (%p243) target = $region20
        $region19: #{tpu_custom_call.1} parent=11 // pred_region
          _
        $region20: #{tpu_custom_call.1} parent=11 // pred_fallthru
          _
        // Predicated region
        $region21: #{tpu_custom_call.1} parent=11 // pred_check
          %p246 = pneg %p142
        $region22: #{tpu_custom_call.1} parent=11 // pred_check_branch
          %248 = sbr.rel (%p246) target = $region24
        $region23: #{tpu_custom_call.1} parent=11 // pred_region
          %s250 = ssub.s32 512, 512
          %251 = vsyncadd [#allocation9], %s250
          %s252 = sshll.u32 [#allocation8], 4
          %s253 = int_to_ptr.vmem [resolvable:$true] %s252
          %258 = dma.hbm_to_vmem [thread:$0]  %s4, 512, %s253, [#allocation9], 128, 128, 8
        $region24: #{tpu_custom_call.1} parent=11 // pred_fallthru
          _
        // Predicated region
        $region25: #{tpu_custom_call.1} parent=11 // pred_check
          %p259 = pneg %p163
        $region26: #{tpu_custom_call.1} parent=11 // pred_check_branch
          %261 = sbr.rel (%p259) target = $region28
        $region27: #{tpu_custom_call.1} parent=11 // pred_region
          _
        $region28: #{tpu_custom_call.1} parent=11 // pred_fallthru
          _
      $region12: #{tpu_custom_call.1} parent=5 // pred_fallthru
        _
      %p262 = scmp.lt.s32.totalorder %s27, 2
      // Predicated region
      $region29: #{tpu_custom_call.1} parent=5 // pred_check
        %p263 = pneg %p262
      $region30: #{tpu_custom_call.1} parent=5 // pred_check_branch
        %265 = sbr.rel (%p263) target = $region32
      $region31: #{tpu_custom_call.1} parent=5 // pred_region
        // Predicated region
        $region33: #{tpu_custom_call.1} parent=31 // pred_check
          %p266 = pneg %p47
        $region34: #{tpu_custom_call.1} parent=31 // pred_check_branch
          %268 = sbr.rel (%p266) target = $region36
        $region35: #{tpu_custom_call.1} parent=31 // pred_region
          %s269 = sand.u32 %s37, 1
          %s270 = scalar_lea.sflag [#allocation3], %s269
          %s271 = sand.u32 %s37, 1
          %s272 = smul.addr %s271, 8
          %s273 = scalar_lea.vmem [#allocation2], %s272
          %s275 = ssub.s32 128, 128
          %276 = vsyncadd %s270, %s275
          %s277 = smul.addr %s27, 128
          %s278 = scalar_lea.hbm %s0, %s277
          %s280 = sshll.u32 %s273, 4
          %s281 = int_to_ptr.vmem [resolvable:$true] %s280
          %283 = dma.hbm_to_vmem [thread:$0]  %s278, 128, %s281, %s270
        $region36: #{tpu_custom_call.1} parent=31 // pred_fallthru
          _
        // Predicated region
        $region37: #{tpu_custom_call.1} parent=31 // pred_check
          %p284 = pneg %p73
        $region38: #{tpu_custom_call.1} parent=31 // pred_check_branch
          %286 = sbr.rel (%p284) target = $region40
        $region39: #{tpu_custom_call.1} parent=31 // pred_region
          %s287 = sand.u32 %s27, 1
          %s288 = scalar_lea.sflag [#allocation6], %s287
          %s289 = sand.u32 %s63, 1
          %s290 = smul.addr %s289, 8
          %s291 = scalar_lea.vmem [#allocation5], %s290
          %s293 = ssub.s32 128, 128
          %294 = vsyncadd %s288, %s293
          %s295 = smul.addr %s27, 128
          %s296 = scalar_lea.hbm %s1, %s295
          %s298 = sshll.u32 %s291, 4
          %s299 = int_to_ptr.vmem [resolvable:$true] %s298
          %301 = dma.hbm_to_vmem [thread:$0]  %s296, 128, %s299, %s288
        $region40: #{tpu_custom_call.1} parent=31 // pred_fallthru
          _
      $region32: #{tpu_custom_call.1} parent=5 // pred_fallthru
        _
      %p302 = scmp.le.s32.totalorder 1, %s27
      %p303 = scmp.lt.s32.totalorder %s27, 3
      %p304 = pnand %p302, %p303
      %p305 = pneg %p304
      // Predicated region
      $region41: #{tpu_custom_call.1} parent=5 // pred_check
        _
      $region42: #{tpu_custom_call.1} parent=5 // pred_check_branch
        %307 = sbr.rel (%p304) target = $region44
      $region43: #{tpu_custom_call.1} parent=5 // pred_region
        %s308 = ssub.s32 %s27, 1
        %s309 = sand.u32 %s40, 1
        %s310 = scalar_lea.sflag [#allocation3], %s309
        %s311 = sand.u32 %s40, 1
        %s312 = smul.addr %s311, 8
        %s313 = scalar_lea.vmem [#allocation2], %s312
        // Predicated region
        $region45: #{tpu_custom_call.1} parent=43 // pred_check
          %p314 = pneg %p53
        $region46: #{tpu_custom_call.1} parent=43 // pred_check_branch
          %316 = sbr.rel (%p314) target = $region48
        $region47: #{tpu_custom_call.1} parent=43 // pred_region
          %317 = dma.done %s310, 128
        $region48: #{tpu_custom_call.1} parent=43 // pred_fallthru
          _
        %s318 = sand.u32 %s32, 1
        %s319 = scalar_lea.sflag [#allocation6], %s318
        %s320 = sand.u32 %s66, 1
        %s321 = smul.addr %s320, 8
        %s322 = scalar_lea.vmem [#allocation5], %s321
        // Predicated region
        $region49: #{tpu_custom_call.1} parent=43 // pred_check
          %p323 = pneg %p79
        $region50: #{tpu_custom_call.1} parent=43 // pred_check_branch
          %325 = sbr.rel (%p323) target = $region52
        $region51: #{tpu_custom_call.1} parent=43 // pred_region
          %326 = dma.done %s319, 128
        $region52: #{tpu_custom_call.1} parent=43 // pred_fallthru
          _
        // Predicated region
        $region53: #{tpu_custom_call.1} parent=43 // pred_check
          %p327 = pneg %p100
        $region54: #{tpu_custom_call.1} parent=43 // pred_check_branch
          %329 = sbr.rel (%p327) target = $region56
        $region55: #{tpu_custom_call.1} parent=43 // pred_region
          %330 = dma.done [#allocation6], 512
        $region56: #{tpu_custom_call.1} parent=43 // pred_fallthru
          _
        // Predicated region
        $region57: #{tpu_custom_call.1} parent=43 // pred_check
          %p331 = pneg %p142
        $region58: #{tpu_custom_call.1} parent=43 // pred_check_branch
          %333 = sbr.rel (%p331) target = $region60
        $region59: #{tpu_custom_call.1} parent=43 // pred_region
          %334 = dma.done [#allocation9], 512
        $region60: #{tpu_custom_call.1} parent=43 // pred_fallthru
          _
        %s335 = sand.u32 %s40, 1
        %s336 = scalar_lea.sflag [#allocation3], %s335
        %s337 = sand.u32 %s40, 1
        %s338 = smul.addr %s337, 8
        %s339 = scalar_lea.vmem [#allocation2], %s338
        %p340 = pneg %p53
        %p341 = pneg %p50
        %s342 = sand.u32 %s32, 1
        %s343 = scalar_lea.sflag [#allocation6], %s342
        %s344 = sand.u32 %s66, 1
        %s345 = smul.addr %s344, 8
        %s346 = scalar_lea.vmem [#allocation5], %s345
        %p347 = pneg %p79
        %p348 = pneg %p76
        %p349 = pneg %p100
        %p350 = pneg %p97
        %p351 = pneg %p121
        %p352 = pneg %p118
        %p353 = pneg %p142
        %p354 = pneg %p139
        %p355 = pneg %p163
        %p356 = pneg %p160
        %p357 = pneg %p189
        %p358 = pneg %p186
        %s359 = sand.u32 %s176, 1
        %s360 = scalar_lea.sflag [#allocation4], %s359
        %s361 = sand.u32 %s176, 1
        %s362 = smul.addr %s361, 8
        %s363 = scalar_lea.vmem [#allocation10], %s362
        %p364 = pneg %p215
        %p365 = pneg %p212
        %s366 = sand.u32 %s202, 1
        %s367 = scalar_lea.sflag [#allocation12], %s366
        %s368 = sand.u32 %s202, 1
        %s369 = smul.addr %s368, 8
        %s370 = scalar_lea.vmem [#allocation11], %s369
        %v371 = vld [vmem:[%s313] sm:$0xff]
        %v372 = vld [vmem:[%s322] sm:$0xff]
        %v373 = vld [vmem:[#allocation7] sm:$0xff]
        %v374 = vld [vmem:[#allocation7 + $0x8] sm:$0xff]
        %v375 = vld [vmem:[#allocation7 + $0x10] sm:$0xff]
        %v376 = vld [vmem:[#allocation7 + $0x18] sm:$0xff]
        %v377 = vld [vmem:[%s3] sm:$0x1]
        %v379 = vlaneseq
        %v380 = vshrl.u32 %v379, 7
        %v381 = vsub.s32 0, %v380
        %v382 = vrot.slane %v377, %v381
        %vm384 = vcmask 261120
        %v386 = vsel %vm384, %v371, 0
        %388 = vmatprep.subr.mxu0 0.0
        %389 = vmatpush1.msra.mxu0 %v373
        %390 = vmatprep.subr.mxu0 0.0
        %391 = vmatpush1.msra.mxu0 %v374
        %392 = vmatprep.subr.mxu0 0.0
        %393 = vmatpush1.msra.mxu0 %v375
        %394 = vmatprep.subr.mxu0 0.0
        %395 = vmatpush1.msra.mxu0 %v376
        %396 = vmatprep.subr.mxu0 0.0
        %397 = vmatpush1.msra.mxu0 0.0
        %398 = vmatprep.subr.mxu0 0.0
        %399 = vmatpush1.msra.mxu0 0.0
        %400 = vmatprep.subr.mxu0 0.0
        %401 = vmatpush1.msra.mxu0 0.0
        %402 = vmatprep.subr.mxu0 0.0
        %403 = vmatpush1.msra.mxu0 0.0
        %404 = vmatprep.subr.mxu0 0.0
        %405 = vmatpush1.msra.mxu0 0.0
        %406 = vmatprep.subr.mxu0 0.0
        %407 = vmatpush1.msra.mxu0 0.0
        %408 = vmatprep.subr.mxu0 0.0
        %409 = vmatpush1.msra.mxu0 0.0
        %410 = vmatprep.subr.mxu0 0.0
        %411 = vmatpush1.msra.mxu0 0.0
        %412 = vmatprep.subr.mxu0 0.0
        %413 = vmatpush1.msra.mxu0 0.0
        %414 = vmatprep.subr.mxu0 0.0
        %415 = vmatpush1.msra.mxu0 0.0
        %416 = vmatprep.subr.mxu0 0.0
        %417 = vmatpush1.msra.mxu0 0.0
        %418 = vmatprep.subr.mxu0 0.0
        %419 = vmatpush1.msra.mxu0 0.0
        %420 = vmatprep.subr.mxu0 0.0
        %421 = vmatpush1.msra.mxu0 0.0
        %422 = vmatprep.subr.mxu0 0.0
        %423 = vmatpush1.msra.mxu0 0.0
        %424 = vmatprep.subr.mxu0 0.0
        %425 = vmatpush1.msra.mxu0 0.0
        %426 = vmatprep.subr.mxu0 0.0
        %427 = vmatpush1.msra.mxu0 0.0
        %428 = vmatprep.subr.mxu0 0.0
        %429 = vmatpush1.msra.mxu0 0.0
        %430 = vmatprep.subr.mxu0 0.0
        %431 = vmatpush1.msra.mxu0 0.0
        %432 = vmatprep.subr.mxu0 0.0
        %433 = vmatpush1.msra.mxu0 0.0
        %434 = vmatprep.subr.mxu0 0.0
        %435 = vmatpush1.msra.mxu0 0.0
        %436 = vmatprep.subr.mxu0 0.0
        %437 = vmatpush1.msra.mxu0 0.0
        %438 = vmatprep.subr.mxu0 0.0
        %439 = vmatpush1.msra.mxu0 0.0
        %440 = vmatprep.subr.mxu0 0.0
        %441 = vmatpush1.msra.mxu0 0.0
        %442 = vmatprep.subr.mxu0 0.0
        %443 = vmatpush1.msra.mxu0 0.0
        %444 = vmatprep.subr.mxu0 0.0
        %445 = vmatpush1.msra.mxu0 0.0
        %446 = vmatprep.subr.mxu0 0.0
        %447 = vmatpush1.msra.mxu0 0.0
        %448 = vmatprep.subr.mxu0 0.0
        %449 = vmatpush1.msra.mxu0 0.0
        %450 = vmatprep.subr.mxu0 0.0
        %451 = vmatpush1.msra.mxu0 0.0
        %452 = vmatprep.mubr.f32.mxu0 0.0
        %453 = vmatmul.mubr.f32.gmra.mrb[0].mxu0 %v386
        %v454 = vpop.f32.mrb[0].mxu0
        %v455 = vadd.f32 %v382, %v454
        %v456 = vpop.f32.mrb[0].mxu0
        %457 = vdwg.mxu0
        %v458 = vld [vmem:[#allocation8] sm:$0xff]
        %v459 = vld [vmem:[#allocation8 + $0x8] sm:$0xff]
        %v460 = vld [vmem:[#allocation8 + $0x10] sm:$0xff]
        %v461 = vld [vmem:[#allocation8 + $0x18] sm:$0xff]
        %v462 = vld [vmem:[%s5] sm:$0x1]
        %v464 = vlaneseq
        %v465 = vshrl.u32 %v464, 7
        %v466 = vsub.s32 0, %v465
        %v467 = vrot.slane %v462, %v466
        %v470 = vsel %vm384, %v372, 0
        %472 = vmatprep.subr.mxu0 0.0
        %473 = vmatpush1.msra.mxu0 %v458
        %474 = vmatprep.subr.mxu0 0.0
        %475 = vmatpush1.msra.mxu0 %v459
        %476 = vmatprep.subr.mxu0 0.0
        %477 = vmatpush1.msra.mxu0 %v460
        %478 = vmatprep.subr.mxu0 0.0
        %479 = vmatpush1.msra.mxu0 %v461
        %480 = vmatprep.subr.mxu0 0.0
        %481 = vmatpush1.msra.mxu0 0.0
        %482 = vmatprep.subr.mxu0 0.0
        %483 = vmatpush1.msra.mxu0 0.0
        %484 = vmatprep.subr.mxu0 0.0
        %485 = vmatpush1.msra.mxu0 0.0
        %486 = vmatprep.subr.mxu0 0.0
        %487 = vmatpush1.msra.mxu0 0.0
        %488 = vmatprep.subr.mxu0 0.0
        %489 = vmatpush1.msra.mxu0 0.0
        %490 = vmatprep.subr.mxu0 0.0
        %491 = vmatpush1.msra.mxu0 0.0
        %492 = vmatprep.subr.mxu0 0.0
        %493 = vmatpush1.msra.mxu0 0.0
        %494 = vmatprep.subr.mxu0 0.0
        %495 = vmatpush1.msra.mxu0 0.0
        %496 = vmatprep.subr.mxu0 0.0
        %497 = vmatpush1.msra.mxu0 0.0
        %498 = vmatprep.subr.mxu0 0.0
        %499 = vmatpush1.msra.mxu0 0.0
        %500 = vmatprep.subr.mxu0 0.0
        %501 = vmatpush1.msra.mxu0 0.0
        %502 = vmatprep.subr.mxu0 0.0
        %503 = vmatpush1.msra.mxu0 0.0
        %504 = vmatprep.subr.mxu0 0.0
        %505 = vmatpush1.msra.mxu0 0.0
        %506 = vmatprep.subr.mxu0 0.0
        %507 = vmatpush1.msra.mxu0 0.0
        %508 = vmatprep.subr.mxu0 0.0
        %509 = vmatpush1.msra.mxu0 0.0
        %510 = vmatprep.subr.mxu0 0.0
        %511 = vmatpush1.msra.mxu0 0.0
        %512 = vmatprep.subr.mxu0 0.0
        %513 = vmatpush1.msra.mxu0 0.0
        %514 = vmatprep.subr.mxu0 0.0
        %515 = vmatpush1.msra.mxu0 0.0
        %516 = vmatprep.subr.mxu0 0.0
        %517 = vmatpush1.msra.mxu0 0.0
        %518 = vmatprep.subr.mxu0 0.0
        %519 = vmatpush1.msra.mxu0 0.0
        %520 = vmatprep.subr.mxu0 0.0
        %521 = vmatpush1.msra.mxu0 0.0
        %522 = vmatprep.subr.mxu0 0.0
        %523 = vmatpush1.msra.mxu0 0.0
        %524 = vmatprep.subr.mxu0 0.0
        %525 = vmatpush1.msra.mxu0 0.0
        %526 = vmatprep.subr.mxu0 0.0
        %527 = vmatpush1.msra.mxu0 0.0
        %528 = vmatprep.subr.mxu0 0.0
        %529 = vmatpush1.msra.mxu0 0.0
        %530 = vmatprep.subr.mxu0 0.0
        %531 = vmatpush1.msra.mxu0 0.0
        %532 = vmatprep.subr.mxu0 0.0
        %533 = vmatpush1.msra.mxu0 0.0
        %534 = vmatprep.subr.mxu0 0.0
        %535 = vmatpush1.msra.mxu0 0.0
        %536 = vmatprep.mubr.f32.mxu0 0.0
        %537 = vmatmul.mubr.f32.gmra.mrb[0].mxu0 %v470
        %v538 = vpop.f32.mrb[0].mxu0
        %v539 = vadd.f32 %v467, %v538
        %v540 = vpop.f32.mrb[0].mxu0
        %541 = vdwg.mxu0
        %v542 = vxor.u32 %v455, 2147483648
        %v543 = vmul.f32 %v542, 1.442695
        %v544 = vpow.pop %v543
        %v545 = vadd.f32 %v544, 1.0
        %v546 = vrcp.pop %v545
        %v547 = vmul.f32 1.0, %v546
        %v548 = vxor.u32 %v539, 2147483648
        %v549 = vmul.f32 %v548, 1.442695
        %v550 = vpow.pop %v549
        %v551 = vadd.f32 %v550, 1.0
        %v552 = vrcp.pop %v551
        %v553 = vmul.f32 1.0, %v552
        %555 = vrot.lane.b32.xlu0 %v539, 96
        %v556 = vpop.permute.xlu0 %555
        %v558 = vsel %vm384, %v455, 0
        %v560 = vsel %vm384, %v556, 0
        %562 = vmatprep.subr.mxu0 0.0
        %563 = vmatpush1.xpose.msra.mxu0 %v560
        %564 = vmatprep.subr.mxu0 0.0
        %565 = vmatpush1.xpose.msra.mxu0 0.0
        %566 = vmatprep.subr.mxu0 0.0
        %567 = vmatpush1.xpose.msra.mxu0 0.0
        %568 = vmatprep.subr.mxu0 0.0
        %569 = vmatpush1.xpose.msra.mxu0 0.0
        %570 = vmatprep.subr.mxu0 0.0
        %571 = vmatpush1.xpose.msra.mxu0 0.0
        %572 = vmatprep.subr.mxu0 0.0
        %573 = vmatpush1.xpose.msra.mxu0 0.0
        %574 = vmatprep.subr.mxu0 0.0
        %575 = vmatpush1.xpose.msra.mxu0 0.0
        %576 = vmatprep.subr.mxu0 0.0
        %577 = vmatpush1.xpose.msra.mxu0 0.0
        %578 = vmatprep.subr.mxu0 0.0
        %579 = vmatpush1.xpose.msra.mxu0 0.0
        %580 = vmatprep.subr.mxu0 0.0
        %581 = vmatpush1.xpose.msra.mxu0 0.0
        %582 = vmatprep.subr.mxu0 0.0
        %583 = vmatpush1.xpose.msra.mxu0 0.0
        %584 = vmatprep.subr.mxu0 0.0
        %585 = vmatpush1.xpose.msra.mxu0 0.0
        %586 = vmatprep.subr.mxu0 0.0
        %587 = vmatpush1.xpose.msra.mxu0 0.0
        %588 = vmatprep.subr.mxu0 0.0
        %589 = vmatpush1.xpose.msra.mxu0 0.0
        %590 = vmatprep.subr.mxu0 0.0
        %591 = vmatpush1.xpose.msra.mxu0 0.0
        %592 = vmatprep.subr.mxu0 0.0
        %593 = vmatpush1.xpose.msra.mxu0 0.0
        %594 = vmatprep.subr.mxu0 0.0
        %595 = vmatpush1.xpose.msra.mxu0 0.0
        %596 = vmatprep.subr.mxu0 0.0
        %597 = vmatpush1.xpose.msra.mxu0 0.0
        %598 = vmatprep.subr.mxu0 0.0
        %599 = vmatpush1.xpose.msra.mxu0 0.0
        %600 = vmatprep.subr.mxu0 0.0
        %601 = vmatpush1.xpose.msra.mxu0 0.0
        %602 = vmatprep.subr.mxu0 0.0
        %603 = vmatpush1.xpose.msra.mxu0 0.0
        %604 = vmatprep.subr.mxu0 0.0
        %605 = vmatpush1.xpose.msra.mxu0 0.0
        %606 = vmatprep.subr.mxu0 0.0
        %607 = vmatpush1.xpose.msra.mxu0 0.0
        %608 = vmatprep.subr.mxu0 0.0
        %609 = vmatpush1.xpose.msra.mxu0 0.0
        %610 = vmatprep.subr.mxu0 0.0
        %611 = vmatpush1.xpose.msra.mxu0 0.0
        %612 = vmatprep.subr.mxu0 0.0
        %613 = vmatpush1.xpose.msra.mxu0 0.0
        %614 = vmatprep.subr.mxu0 0.0
        %615 = vmatpush1.xpose.msra.mxu0 0.0
        %616 = vmatprep.subr.mxu0 0.0
        %617 = vmatpush1.xpose.msra.mxu0 0.0
        %618 = vmatprep.subr.mxu0 0.0
        %619 = vmatpush1.xpose.msra.mxu0 0.0
        %620 = vmatprep.subr.mxu0 0.0
        %621 = vmatpush1.xpose.msra.mxu0 0.0
        %622 = vmatprep.subr.mxu0 0.0
        %623 = vmatpush1.xpose.msra.mxu0 0.0
        %624 = vmatprep.subr.mxu0 0.0
        %625 = vmatpush1.xpose.msra.mxu0 0.0
        %626 = vmatprep.mubr.f32.mxu0 0.0
        %627 = vmatmul.mubr.f32.gmra.mrb[0].mxu0 %v558
        %v628 = vpop.f32.mrb[0].mxu0
        %v629 = vadd.f32 0.0, %v628
        %v630 = vpop.f32.mrb[0].mxu0
        %631 = vdwg.mxu0
        %vm632 = vcmask 64512
        %v633 = vsel %vm632, %v629, -inf
        %634 = vmax.xlane.f32.xlu0 %v633
        %v635 = vpop.xlane.xlu0 %634
        %v636 = vsub.f32 %v629, %v635
        %v637 = vmul.f32 %v636, 1.442695
        %v638 = vpow.pop %v637
        %v639 = vsel %vm632, %v638, 0.0
        %640 = vadd.xlane.f32.xlu0 %v639
        %v641 = vpop.xlane.xlu0 %640
        %v642 = vrcp.pop %v641
        %v643 = vmul.f32 %v638, %v642
        %644 = vrot.lane.b32.xlu0 %v539, 64
        %v645 = vpop.permute.xlu0 %644
        %v648 = vsel %vm632, %v643, 0
        %650 = vmatprep.subr.mxu0 0.0
        %651 = vmatpush1.msra.mxu0 %v645
        %652 = vmatprep.subr.mxu0 0.0
        %653 = vmatpush1.msra.mxu0 0.0
        %654 = vmatprep.subr.mxu0 0.0
        %655 = vmatpush1.msra.mxu0 0.0
        %656 = vmatprep.subr.mxu0 0.0
        %657 = vmatpush1.msra.mxu0 0.0
        %658 = vmatprep.subr.mxu0 0.0
        %659 = vmatpush1.msra.mxu0 0.0
        %660 = vmatprep.subr.mxu0 0.0
        %661 = vmatpush1.msra.mxu0 0.0
        %662 = vmatprep.subr.mxu0 0.0
        %663 = vmatpush1.msra.mxu0 0.0
        %664 = vmatprep.subr.mxu0 0.0
        %665 = vmatpush1.msra.mxu0 0.0
        %666 = vmatprep.subr.mxu0 0.0
        %667 = vmatpush1.msra.mxu0 0.0
        %668 = vmatprep.subr.mxu0 0.0
        %669 = vmatpush1.msra.mxu0 0.0
        %670 = vmatprep.subr.mxu0 0.0
        %671 = vmatpush1.msra.mxu0 0.0
        %672 = vmatprep.subr.mxu0 0.0
        %673 = vmatpush1.msra.mxu0 0.0
        %674 = vmatprep.subr.mxu0 0.0
        %675 = vmatpush1.msra.mxu0 0.0
        %676 = vmatprep.subr.mxu0 0.0
        %677 = vmatpush1.msra.mxu0 0.0
        %678 = vmatprep.subr.mxu0 0.0
        %679 = vmatpush1.msra.mxu0 0.0
        %680 = vmatprep.subr.mxu0 0.0
        %681 = vmatpush1.msra.mxu0 0.0
        %682 = vmatprep.subr.mxu0 0.0
        %683 = vmatpush1.msra.mxu0 0.0
        %684 = vmatprep.subr.mxu0 0.0
        %685 = vmatpush1.msra.mxu0 0.0
        %686 = vmatprep.subr.mxu0 0.0
        %687 = vmatpush1.msra.mxu0 0.0
        %688 = vmatprep.subr.mxu0 0.0
        %689 = vmatpush1.msra.mxu0 0.0
        %690 = vmatprep.subr.mxu0 0.0
        %691 = vmatpush1.msra.mxu0 0.0
        %692 = vmatprep.subr.mxu0 0.0
        %693 = vmatpush1.msra.mxu0 0.0
        %694 = vmatprep.subr.mxu0 0.0
        %695 = vmatpush1.msra.mxu0 0.0
        %696 = vmatprep.subr.mxu0 0.0
        %697 = vmatpush1.msra.mxu0 0.0
        %698 = vmatprep.subr.mxu0 0.0
        %699 = vmatpush1.msra.mxu0 0.0
        %700 = vmatprep.subr.mxu0 0.0
        %701 = vmatpush1.msra.mxu0 0.0
        %702 = vmatprep.subr.mxu0 0.0
        %703 = vmatpush1.msra.mxu0 0.0
        %704 = vmatprep.subr.mxu0 0.0
        %705 = vmatpush1.msra.mxu0 0.0
        %706 = vmatprep.subr.mxu0 0.0
        %707 = vmatpush1.msra.mxu0 0.0
        %708 = vmatprep.subr.mxu0 0.0
        %709 = vmatpush1.msra.mxu0 0.0
        %710 = vmatprep.subr.mxu0 0.0
        %711 = vmatpush1.msra.mxu0 0.0
        %712 = vmatprep.subr.mxu0 0.0
        %713 = vmatpush1.msra.mxu0 0.0
        %714 = vmatprep.mubr.f32.mxu0 0.0
        %715 = vmatmul.mubr.f32.gmra.mrb[0].mxu0 %v648
        %v716 = vpop.f32.mrb[0].mxu0
        %v717 = vadd.f32 0.0, %v716
        %v718 = vpop.f32.mrb[0].mxu0
        %719 = vdwg.mxu0
        %720 = vrot.lane.b32.xlu0 %v455, 96
        %v721 = vpop.permute.xlu0 %720
        %v722 = vsel %vm384, %v539, 0
        %v724 = vsel %vm384, %v721, 0
        %726 = vmatprep.subr.mxu0 0.0
        %727 = vmatpush1.xpose.msra.mxu0 %v724
        %728 = vmatprep.subr.mxu0 0.0
        %729 = vmatpush1.xpose.msra.mxu0 0.0
        %730 = vmatprep.subr.mxu0 0.0
        %731 = vmatpush1.xpose.msra.mxu0 0.0
        %732 = vmatprep.subr.mxu0 0.0
        %733 = vmatpush1.xpose.msra.mxu0 0.0
        %734 = vmatprep.subr.mxu0 0.0
        %735 = vmatpush1.xpose.msra.mxu0 0.0
        %736 = vmatprep.subr.mxu0 0.0
        %737 = vmatpush1.xpose.msra.mxu0 0.0
        %738 = vmatprep.subr.mxu0 0.0
        %739 = vmatpush1.xpose.msra.mxu0 0.0
        %740 = vmatprep.subr.mxu0 0.0
        %741 = vmatpush1.xpose.msra.mxu0 0.0
        %742 = vmatprep.subr.mxu0 0.0
        %743 = vmatpush1.xpose.msra.mxu0 0.0
        %744 = vmatprep.subr.mxu0 0.0
        %745 = vmatpush1.xpose.msra.mxu0 0.0
        %746 = vmatprep.subr.mxu0 0.0
        %747 = vmatpush1.xpose.msra.mxu0 0.0
        %748 = vmatprep.subr.mxu0 0.0
        %749 = vmatpush1.xpose.msra.mxu0 0.0
        %750 = vmatprep.subr.mxu0 0.0
        %751 = vmatpush1.xpose.msra.mxu0 0.0
        %752 = vmatprep.subr.mxu0 0.0
        %753 = vmatpush1.xpose.msra.mxu0 0.0
        %754 = vmatprep.subr.mxu0 0.0
        %755 = vmatpush1.xpose.msra.mxu0 0.0
        %756 = vmatprep.subr.mxu0 0.0
        %757 = vmatpush1.xpose.msra.mxu0 0.0
        %758 = vmatprep.subr.mxu0 0.0
        %759 = vmatpush1.xpose.msra.mxu0 0.0
        %760 = vmatprep.subr.mxu0 0.0
        %761 = vmatpush1.xpose.msra.mxu0 0.0
        %762 = vmatprep.subr.mxu0 0.0
        %763 = vmatpush1.xpose.msra.mxu0 0.0
        %764 = vmatprep.subr.mxu0 0.0
        %765 = vmatpush1.xpose.msra.mxu0 0.0
        %766 = vmatprep.subr.mxu0 0.0
        %767 = vmatpush1.xpose.msra.mxu0 0.0
        %768 = vmatprep.subr.mxu0 0.0
        %769 = vmatpush1.xpose.msra.mxu0 0.0
        %770 = vmatprep.subr.mxu0 0.0
        %771 = vmatpush1.xpose.msra.mxu0 0.0
        %772 = vmatprep.subr.mxu0 0.0
        %773 = vmatpush1.xpose.msra.mxu0 0.0
        %774 = vmatprep.subr.mxu0 0.0
        %775 = vmatpush1.xpose.msra.mxu0 0.0
        %776 = vmatprep.subr.mxu0 0.0
        %777 = vmatpush1.xpose.msra.mxu0 0.0
        %778 = vmatprep.subr.mxu0 0.0
        %779 = vmatpush1.xpose.msra.mxu0 0.0
        %780 = vmatprep.subr.mxu0 0.0
        %781 = vmatpush1.xpose.msra.mxu0 0.0
        %782 = vmatprep.subr.mxu0 0.0
        %783 = vmatpush1.xpose.msra.mxu0 0.0
        %784 = vmatprep.subr.mxu0 0.0
        %785 = vmatpush1.xpose.msra.mxu0 0.0
        %786 = vmatprep.subr.mxu0 0.0
        %787 = vmatpush1.xpose.msra.mxu0 0.0
        %788 = vmatprep.subr.mxu0 0.0
        %789 = vmatpush1.xpose.msra.mxu0 0.0
        %790 = vmatprep.mubr.f32.mxu0 0.0
        %791 = vmatmul.mubr.f32.gmra.mrb[0].mxu0 %v722
        %v792 = vpop.f32.mrb[0].mxu0
        %v793 = vadd.f32 0.0, %v792
        %v794 = vpop.f32.mrb[0].mxu0
        %795 = vdwg.mxu0
        %v796 = vsel %vm632, %v793, -inf
        %797 = vmax.xlane.f32.xlu0 %v796
        %v798 = vpop.xlane.xlu0 %797
        %v799 = vsub.f32 %v793, %v798
        %v800 = vmul.f32 %v799, 1.442695
        %v801 = vpow.pop %v800
        %v802 = vsel %vm632, %v801, 0.0
        %803 = vadd.xlane.f32.xlu0 %v802
        %v804 = vpop.xlane.xlu0 %803
        %v805 = vrcp.pop %v804
        %v806 = vmul.f32 %v801, %v805
        %807 = vrot.lane.b32.xlu0 %v455, 64
        %v808 = vpop.permute.xlu0 %807
        %v811 = vsel %vm632, %v806, 0
        %813 = vmatprep.subr.mxu0 0.0
        %814 = vmatpush1.msra.mxu0 %v808
        %815 = vmatprep.subr.mxu0 0.0
        %816 = vmatpush1.msra.mxu0 0.0
        %817 = vmatprep.subr.mxu0 0.0
        %818 = vmatpush1.msra.mxu0 0.0
        %819 = vmatprep.subr.mxu0 0.0
        %820 = vmatpush1.msra.mxu0 0.0
        %821 = vmatprep.subr.mxu0 0.0
        %822 = vmatpush1.msra.mxu0 0.0
        %823 = vmatprep.subr.mxu0 0.0
        %824 = vmatpush1.msra.mxu0 0.0
        %825 = vmatprep.subr.mxu0 0.0
        %826 = vmatpush1.msra.mxu0 0.0
        %827 = vmatprep.subr.mxu0 0.0
        %828 = vmatpush1.msra.mxu0 0.0
        %829 = vmatprep.subr.mxu0 0.0
        %830 = vmatpush1.msra.mxu0 0.0
        %831 = vmatprep.subr.mxu0 0.0
        %832 = vmatpush1.msra.mxu0 0.0
        %833 = vmatprep.subr.mxu0 0.0
        %834 = vmatpush1.msra.mxu0 0.0
        %835 = vmatprep.subr.mxu0 0.0
        %836 = vmatpush1.msra.mxu0 0.0
        %837 = vmatprep.subr.mxu0 0.0
        %838 = vmatpush1.msra.mxu0 0.0
        %839 = vmatprep.subr.mxu0 0.0
        %840 = vmatpush1.msra.mxu0 0.0
        %841 = vmatprep.subr.mxu0 0.0
        %842 = vmatpush1.msra.mxu0 0.0
        %843 = vmatprep.subr.mxu0 0.0
        %844 = vmatpush1.msra.mxu0 0.0
        %845 = vmatprep.subr.mxu0 0.0
        %846 = vmatpush1.msra.mxu0 0.0
        %847 = vmatprep.subr.mxu0 0.0
        %848 = vmatpush1.msra.mxu0 0.0
        %849 = vmatprep.subr.mxu0 0.0
        %850 = vmatpush1.msra.mxu0 0.0
        %851 = vmatprep.subr.mxu0 0.0
        %852 = vmatpush1.msra.mxu0 0.0
        %853 = vmatprep.subr.mxu0 0.0
        %854 = vmatpush1.msra.mxu0 0.0
        %855 = vmatprep.subr.mxu0 0.0
        %856 = vmatpush1.msra.mxu0 0.0
        %857 = vmatprep.subr.mxu0 0.0
        %858 = vmatpush1.msra.mxu0 0.0
        %859 = vmatprep.subr.mxu0 0.0
        %860 = vmatpush1.msra.mxu0 0.0
        %861 = vmatprep.subr.mxu0 0.0
        %862 = vmatpush1.msra.mxu0 0.0
        %863 = vmatprep.subr.mxu0 0.0
        %864 = vmatpush1.msra.mxu0 0.0
        %865 = vmatprep.subr.mxu0 0.0
        %866 = vmatpush1.msra.mxu0 0.0
        %867 = vmatprep.subr.mxu0 0.0
        %868 = vmatpush1.msra.mxu0 0.0
        %869 = vmatprep.subr.mxu0 0.0
        %870 = vmatpush1.msra.mxu0 0.0
        %871 = vmatprep.subr.mxu0 0.0
        %872 = vmatpush1.msra.mxu0 0.0
        %873 = vmatprep.subr.mxu0 0.0
        %874 = vmatpush1.msra.mxu0 0.0
        %875 = vmatprep.subr.mxu0 0.0
        %876 = vmatpush1.msra.mxu0 0.0
        %877 = vmatprep.mubr.f32.mxu0 0.0
        %878 = vmatmul.mubr.f32.gmra.mrb[0].mxu0 %v811
        %v879 = vpop.f32.mrb[0].mxu0
        %v880 = vadd.f32 0.0, %v879
        %v881 = vpop.f32.mrb[0].mxu0
        %882 = vdwg.mxu0
        %884 = vrot.lane.b32.xlu0 %v717, 96
        %v885 = vpop.permute.xlu0 %884
        %v887 = vmul.f32 %v547, %v885
        %889 = vrot.lane.b32.xlu0 %v887, 32
        %v890 = vpop.permute.xlu0 %889
        %v892 = vadd.f32 %v371, %v890
        %893 = vst.msk [vmem:[%s363] sm:$0xff] %vm384, %v892
        %895 = vrot.lane.b32.xlu0 %v880, 96
        %v896 = vpop.permute.xlu0 %895
        %v898 = vmul.f32 %v553, %v896
        %900 = vrot.lane.b32.xlu0 %v898, 32
        %v901 = vpop.permute.xlu0 %900
        %v903 = vadd.f32 %v372, %v901
        %904 = vst.msk [vmem:[%s370] sm:$0xff] %vm384, %v903
        %s905 = sand.u32 %s176, 1
        %s906 = scalar_lea.sflag [#allocation4], %s905
        %s907 = sand.u32 %s176, 1
        %s908 = smul.addr %s907, 8
        %s909 = scalar_lea.vmem [#allocation10], %s908
        %s910 = sand.u32 %s202, 1
        %s911 = scalar_lea.sflag [#allocation12], %s910
        %s912 = sand.u32 %s202, 1
        %s913 = smul.addr %s912, 8
        %s914 = scalar_lea.vmem [#allocation11], %s913
        // Predicated region
        $region61: #{tpu_custom_call.1} parent=43 // pred_check
          %p915 = pneg %p186
        $region62: #{tpu_custom_call.1} parent=43 // pred_check_branch
          %917 = sbr.rel (%p915) target = $region64
        $region63: #{tpu_custom_call.1} parent=43 // pred_region
          %s919 = ssub.s32 128, 128
          %920 = vsyncadd %s906, %s919
          %s921 = smul.addr %s32, 128
          %s922 = scalar_lea.hbm %s6, %s921
          %s924 = sshll.u32 %s909, 4
          %s925 = int_to_ptr.vmem [resolvable:$true] %s924
          %927 = dma.vmem_to_hbm [thread:$0]  %s925, 128, %s922, %s906
        $region64: #{tpu_custom_call.1} parent=43 // pred_fallthru
          _
        // Predicated region
        $region65: #{tpu_custom_call.1} parent=43 // pred_check
          %p928 = pneg %p212
        $region66: #{tpu_custom_call.1} parent=43 // pred_check_branch
          %930 = sbr.rel (%p928) target = $region68
        $region67: #{tpu_custom_call.1} parent=43 // pred_region
          %s932 = ssub.s32 128, 128
          %933 = vsyncadd %s911, %s932
          %s934 = smul.addr %s32, 128
          %s935 = scalar_lea.hbm %s7, %s934
          %s937 = sshll.u32 %s914, 4
          %s938 = int_to_ptr.vmem [resolvable:$true] %s937
          %940 = dma.vmem_to_hbm [thread:$0]  %s938, 128, %s935, %s911
        $region68: #{tpu_custom_call.1} parent=43 // pred_fallthru
          _
      $region44: #{tpu_custom_call.1} parent=5 // pred_fallthru
        _
      %p941 = scmp.le.s32.totalorder 2, %s27
      // Predicated region
      $region69: #{tpu_custom_call.1} parent=5 // pred_check
        %p942 = pneg %p941
      $region70: #{tpu_custom_call.1} parent=5 // pred_check_branch
        %944 = sbr.rel (%p942) target = $region72
      $region71: #{tpu_custom_call.1} parent=5 // pred_region
        %s945 = ssub.s32 %s27, 2
        // Predicated region
        $region73: #{tpu_custom_call.1} parent=71 // pred_check
          %p946 = pneg %p192
        $region74: #{tpu_custom_call.1} parent=71 // pred_check_branch
          %948 = sbr.rel (%p946) target = $region76
        $region75: #{tpu_custom_call.1} parent=71 // pred_region
          %s949 = sand.u32 %s177, 1
          %s950 = scalar_lea.sflag [#allocation4], %s949
          %s951 = sand.u32 %s177, 1
          %s952 = smul.addr %s951, 8
          %s953 = scalar_lea.vmem [#allocation10], %s952
          %954 = dma.done %s950, 128
        $region76: #{tpu_custom_call.1} parent=71 // pred_fallthru
          _
        // Predicated region
        $region77: #{tpu_custom_call.1} parent=71 // pred_check
          %p955 = pneg %p218
        $region78: #{tpu_custom_call.1} parent=71 // pred_check_branch
          %957 = sbr.rel (%p955) target = $region80
        $region79: #{tpu_custom_call.1} parent=71 // pred_region
          %s958 = sand.u32 %s203, 1
          %s959 = scalar_lea.sflag [#allocation12], %s958
          %s960 = sand.u32 %s203, 1
          %s961 = smul.addr %s960, 8
          %s962 = scalar_lea.vmem [#allocation11], %s961
          %963 = dma.done %s959, 128
        $region80: #{tpu_custom_call.1} parent=71 // pred_fallthru
          _
      $region72: #{tpu_custom_call.1} parent=5 // pred_fallthru
        _
    $region6: #{tpu_custom_call.1} parent=1 // loop_footer
      %s31 = sadd.s32 1, %s27
    $region7: #{tpu_custom_call.1} parent=1 // loop_footer_branch
      %26 = sbr.rel target = $region3
    $region8: #{tpu_custom_call.1} parent=1 // loop_exit
      _
    %964 = vsyncpa [#allocation3], 1
    %s965 = scalar_lea.sflag [#allocation3], 1
    %966 = vsyncpa %s965, 1
    %967 = vsyncpa [#allocation6], 1
    %s968 = scalar_lea.sflag [#allocation6], 1
    %969 = vsyncpa %s968, 1
    %970 = vsyncpa [#allocation9], 1
    %971 = vsyncpa [#allocation4], 1
    %s972 = scalar_lea.sflag [#allocation4], 1
    %973 = vsyncpa %s972, 1
    %974 = vsyncpa [#allocation12], 1
    %s975 = scalar_lea.sflag [#allocation12], 1
    %976 = vsyncpa %s975, 1

</llo_original>
